<compile_context>
chip_gen: v7x
topology: tpu7x:2x2x1
jax: 0.10.0
libtpu: 0.0.40
codegen_flags: <defaults>
</compile_context>

<pallas_src>
import math

import jax
import jax.numpy as jnp
from jax.experimental import pallas as pl
from jax.experimental.pallas import tpu as pltpu

_SQRT_HALF = 1.0 / math.sqrt(2.0)
_LN_EPS = 1e-5


# ------------------------------ glue / setup --------------------------------

def dense_mean_adj(edge_index, n_src, n_dst):
    """Row-normalized dense adjacency so that A @ X_src == scatter-mean of messages."""
    src, dst = edge_index[0], edge_index[1]
    a = jnp.zeros((n_dst, n_src), jnp.float32).at[dst, src].add(1.0)
    deg = jnp.sum(a, axis=1, keepdims=True)
    return a / jnp.maximum(deg, 1.0)


# --------------------------- fused forward kernel ----------------------------

def _build_fused_kernel(node_types, proj_types, edge_types, cnt_per_dst):
    """Kernel body specialized (at trace time) to the static hetero-graph schema.

    Ref order:
      [emb per node type]
      + [x, w_proj_t, b_proj per projected node type]
      + [adj, w_cat, b_l per edge type]            (w_cat/b_l stacked over layers)
      + [gamma, beta]                              (stacked over layers)
      + [h per node type]                          (outputs; also the layer carry)
    """

    def kernel(*refs):
        i = 0
        emb = {}
        for nt in node_types:
            emb[nt] = refs[i]; i += 1
        proj = {}
        for nt in proj_types:
            proj[nt] = (refs[i], refs[i + 1], refs[i + 2]); i += 3
        adj, wcat, bl = {}, {}, {}
        for et in edge_types:
            adj[et] = refs[i]; wcat[et] = refs[i + 1]; bl[et] = refs[i + 2]; i += 3
        gamma_ref = refs[i]; beta_ref = refs[i + 1]; i += 2
        h = {}
        for nt in node_types:
            h[nt] = refs[i]; i += 1

        layer = pl.program_id(0)

        # ---- layer-0 prologue: embedding lookup (+ optional feature projection) ----
        @pl.when(layer == 0)
        def _():
            for nt in node_types:
                v = emb[nt][...]
                if nt in proj:
                    x_ref, w_ref, b_ref = proj[nt]
                    v = v + jnp.dot(x_ref[...], w_ref[...],
                                    preferred_element_type=jnp.float32) + b_ref[...]
                h[nt][...] = v

        # ---- one HeteroConv layer, fully VMEM-resident ----
        h_cur = {nt: h[nt][...] for nt in node_types}

        acc = {}
        for et in edge_types:
            s, _, d = et
            # scatter-mean aggregation as dense row-normalized adjacency matmul (MXU)
            agg = jnp.dot(adj[et][...], h_cur[s], preferred_element_type=jnp.float32)
            # merged lin_l / lin_r matmul:  [agg | x_dst] @ [Wl ; Wr]   (K = 2H)
            cat = jnp.concatenate([agg, h_cur[d]], axis=-1)
            out = jnp.dot(cat, wcat[et][...],
                          preferred_element_type=jnp.float32) + bl[et][...]
            acc[d] = (acc[d] + out) if d in acc else out

        gamma = gamma_ref[...]
        beta = beta_ref[...]
        for nt in node_types:
            x = acc[nt] * (1.0 / cnt_per_dst[nt])        # HeteroConv aggr='mean'
            g = 0.5 * x * (1.0 + jax.lax.erf(x * _SQRT_HALF))   # exact (erf) GELU
            mu = jnp.mean(g, axis=-1, keepdims=True)
            dlt = g - mu
            var = jnp.mean(dlt * dlt, axis=-1, keepdims=True)
            h[nt][...] = dlt * jax.lax.rsqrt(var + _LN_EPS) * gamma + beta

    return kernel


def timbre_gnn_forward(params, graph):
    node_types = tuple(graph['node_types'])
    edge_types = tuple(graph['edge_types'])
    num_nodes = graph['num_nodes']
    layers = params['layers']
    L = len(layers)
    H = params['emb'][node_types[0]].shape[1]

    # Fused all-layers kernel assumes every node type receives messages each layer,
    # so the per-layer structure is uniform across the grid.
    dsts = {d for (_s, _r, d) in edge_types}
    assert set(node_types) <= dsts, "every node type must receive messages"
    # TODO(synk): general HeteroConv live-set shrinkage (node types that never receive
    # messages are dropped after layer 1) would need per-layer kernels instead.

    cnt_per_dst = {nt: sum(1 for (_s, _r, d) in edge_types if d == nt)
                   for nt in node_types}
    proj_types = tuple(nt for nt in node_types
                       if nt in params['proj'] and nt in graph['x'])

    # --- glue: dense mean-adjacency operators + per-layer weight stacking ---
    adj = {et: dense_mean_adj(graph['edge_index'][et],
                              num_nodes[et[0]], num_nodes[et[2]])
           for et in edge_types}
    wcat = {et: jnp.stack([jnp.concatenate([lay['conv'][et]['wl_t'],
                                            lay['conv'][et]['wr_t']], axis=0)
                           for lay in layers])                      # [L, 2H, H]
            for et in edge_types}
    blst = {et: jnp.stack([lay['conv'][et]['bl'] for lay in layers])[:, None, :]
            for et in edge_types}                                    # [L, 1, H]
    gamma = jnp.stack([lay['gamma'] for lay in layers])[:, None, :]  # [L, 1, H]
    beta = jnp.stack([lay['beta'] for lay in layers])[:, None, :]    # [L, 1, H]

    # --- assemble the single fused pallas_call ---
    inputs, in_specs = [], []
    for nt in node_types:
        inputs.append(params['emb'][nt])
        in_specs.append(pl.BlockSpec((num_nodes[nt], H), lambda l: (0, 0)))
    for nt in proj_types:
        x = graph['x'][nt]
        inputs += [x, params['proj'][nt]['w_t'], params['proj'][nt]['b'].reshape(1, H)]
        in_specs += [pl.BlockSpec(x.shape, lambda l: (0, 0)),
                     pl.BlockSpec((x.shape[1], H), lambda l: (0, 0)),
                     pl.BlockSpec((1, H), lambda l: (0, 0))]
    for et in edge_types:
        s, _, d = et
        inputs += [adj[et], wcat[et], blst[et]]
        in_specs += [pl.BlockSpec((num_nodes[d], num_nodes[s]), lambda l: (0, 0)),
                     pl.BlockSpec((None, 2 * H, H), lambda l: (l, 0, 0)),
                     pl.BlockSpec((None, 1, H), lambda l: (l, 0, 0))]
    inputs += [gamma, beta]
    in_specs += [pl.BlockSpec((None, 1, H), lambda l: (l, 0, 0)),
                 pl.BlockSpec((None, 1, H), lambda l: (l, 0, 0))]

    out_shape = tuple(jax.ShapeDtypeStruct((num_nodes[nt], H), jnp.float32)
                      for nt in node_types)
    # constant block index across the layer axis -> h stays resident in VMEM (carry)
    out_specs = [pl.BlockSpec((num_nodes[nt], H), lambda l: (0, 0))
                 for nt in node_types]

    kernel = _build_fused_kernel(node_types, proj_types, edge_types, cnt_per_dst)

    outs = pl.pallas_call(
        kernel,
        out_shape=out_shape,
        grid_spec=pltpu.PrefetchScalarGridSpec(
            num_scalar_prefetch=0,
            grid=(L,),
            in_specs=in_specs,
            out_specs=out_specs),
        compiler_params=pltpu.CompilerParams(
            dimension_semantics=("arbitrary",)),
    )(*inputs)

    return {nt: outs[k] for k, nt in enumerate(node_types)}


# ------------------------- pure-JAX reference (check) -------------------------

def reference_forward(params, graph):
    erf = jax.scipy.special.erf
    node_types = graph['node_types']
    edge_types = graph['edge_types']
    h = {}
    for nt in node_types:
        emb = params['emb'][nt]
        if nt in params['proj'] and nt in graph['x']:
            p = params['proj'][nt]
            emb = emb + graph['x'][nt] @ p['w_t'] + p['b']
        h[nt] = emb
    adj = {et: dense_mean_adj(graph['edge_index'][et],
                              graph['num_nodes'][et[0]], graph['num_nodes'][et[2]])
           for et in edge_types}
    for layer in params['layers']:
        acc, cnt = {}, {}
        for et in edge_types:
            s, _, d = et
            cp = layer['conv'][et]
            out = (adj[et] @ h[s]) @ cp['wl_t'] + cp['bl'] + h[d] @ cp['wr_t']
            acc[d] = acc.get(d, 0.0) + out
            cnt[d] = cnt.get(d, 0) + 1
        newh = {}
        for nt in acc:
            x = acc[nt] / cnt[nt]
            g = 0.5 * x * (1.0 + erf(x / jnp.sqrt(2.0)))
            mu = g.mean(-1, keepdims=True)
            var = ((g - mu) ** 2).mean(-1, keepdims=True)
            newh[nt] = (g - mu) / jnp.sqrt(var + _LN_EPS) * layer['gamma'] + layer['beta']
        h = newh
    return h


# ------------------------------------ main ------------------------------------

if __name__ == "__main__":
    H = 32
    NUM_LAYERS = 3
    node_types = ('shortlist', 'api')
    edge_types = (('shortlist', 'calls', 'api'), ('api', 'rev_calls', 'shortlist'))
    num_nodes = {'shortlist': 16, 'api': 24}
    feature_dims = {'shortlist': 8}
    num_edges = 48

    keys = iter(jax.random.split(jax.random.PRNGKey(0), 64))

    params = {
        'emb': {nt: jax.random.normal(next(keys), (num_nodes[nt], H), jnp.float32)
                for nt in node_types},
        'proj': {nt: {'w_t': 0.1 * jax.random.normal(next(keys), (dim, H), jnp.float32),
                      'b': 0.1 * jax.random.normal(next(keys), (H,), jnp.float32)}
                 for nt, dim in feature_dims.items()},
        'layers': [],
    }
    for _ in range(NUM_LAYERS):
        conv = {}
        for et in edge_types:
            conv[et] = {
                'wl_t': 0.2 * jax.random.normal(next(keys), (H, H), jnp.float32),
                'wr_t': 0.2 * jax.random.normal(next(keys), (H, H), jnp.float32),
                'bl': 0.1 * jax.random.normal(next(keys), (H,), jnp.float32),
            }
        params['layers'].append({'conv': conv,
                                 'gamma': jnp.ones((H,), jnp.float32),   # LayerNorm defaults
                                 'beta': jnp.zeros((H,), jnp.float32)})

    graph = {
        'node_types': node_types,
        'edge_types': edge_types,
        'num_nodes': num_nodes,
        'x': {'shortlist': jax.random.normal(
            next(keys), (num_nodes['shortlist'], feature_dims['shortlist']), jnp.float32)},
        'edge_index': {},
    }
    for et in edge_types:
        s, _, d = et
        src = jax.random.randint(next(keys), (num_edges,), 0, num_nodes[s])
        dst = jax.random.randint(next(keys), (num_edges,), 0, num_nodes[d])
        graph['edge_index'][et] = jnp.stack([src, dst]).astype(jnp.int32)

    out = timbre_gnn_forward(params, graph)
    out = {nt: jax.block_until_ready(v) for nt, v in out.items()}

    ref = reference_forward(params, graph)
    for nt in out:
        assert out[nt].shape == (num_nodes[nt], H)
        assert jnp.allclose(out[nt], ref[nt], rtol=2e-3, atol=2e-3), nt

    print("KERNEL_OK")
</pallas_src>

<mosaic_0001>
module attributes {stable_mosaic.version = 11 : i64} {
  func.func @kernel(%arg0: i32, %arg1: memref<16x32xf32, #tpu.memory_space<vmem>>, %arg2: memref<24x32xf32, #tpu.memory_space<vmem>>, %arg3: memref<16x8xf32, #tpu.memory_space<vmem>>, %arg4: memref<8x32xf32, #tpu.memory_space<vmem>>, %arg5: memref<1x32xf32, #tpu.memory_space<vmem>>, %arg6: memref<24x16xf32, #tpu.memory_space<vmem>>, %arg7: memref<1x64x32xf32, #tpu.memory_space<vmem>>, %arg8: memref<1x1x32xf32, #tpu.memory_space<vmem>>, %arg9: memref<16x24xf32, #tpu.memory_space<vmem>>, %arg10: memref<1x64x32xf32, #tpu.memory_space<vmem>>, %arg11: memref<1x1x32xf32, #tpu.memory_space<vmem>>, %arg12: memref<1x1x32xf32, #tpu.memory_space<vmem>>, %arg13: memref<1x1x32xf32, #tpu.memory_space<vmem>>, %arg14: memref<16x32xf32, #tpu.memory_space<vmem>>, %arg15: memref<24x32xf32, #tpu.memory_space<vmem>>) attributes {dimension_semantics = [#tpu.dimension_semantics<arbitrary>], iteration_bounds = array<i64: 3>, scalar_prefetch = 0 : i64, scratch_operands = 0 : i64, tpu.core_type = #tpu.core_type<tc>, window_params = [{pipeline_mode = #tpu.pipeline_mode<synchronous>, transform_indices = @transform_0, window_bounds = array<i64: 16, 32>}, {pipeline_mode = #tpu.pipeline_mode<synchronous>, transform_indices = @transform_1, window_bounds = array<i64: 24, 32>}, {pipeline_mode = #tpu.pipeline_mode<synchronous>, transform_indices = @transform_2, window_bounds = array<i64: 16, 8>}, {pipeline_mode = #tpu.pipeline_mode<synchronous>, transform_indices = @transform_3, window_bounds = array<i64: 8, 32>}, {pipeline_mode = #tpu.pipeline_mode<synchronous>, transform_indices = @transform_4, window_bounds = array<i64: 1, 32>}, {pipeline_mode = #tpu.pipeline_mode<synchronous>, transform_indices = @transform_5, window_bounds = array<i64: 24, 16>}, {transform_indices = @transform_6, window_bounds = array<i64: 1, 64, 32>}, {transform_indices = @transform_7, window_bounds = array<i64: 1, 1, 32>}, {pipeline_mode = #tpu.pipeline_mode<synchronous>, transform_indices = @transform_8, window_bounds = array<i64: 16, 24>}, {transform_indices = @transform_9, window_bounds = array<i64: 1, 64, 32>}, {transform_indices = @transform_10, window_bounds = array<i64: 1, 1, 32>}, {transform_indices = @transform_11, window_bounds = array<i64: 1, 1, 32>}, {transform_indices = @transform_12, window_bounds = array<i64: 1, 1, 32>}, {pipeline_mode = #tpu.pipeline_mode<synchronous>, transform_indices = @transform_13, window_bounds = array<i64: 16, 32>}, {pipeline_mode = #tpu.pipeline_mode<synchronous>, transform_indices = @transform_14, window_bounds = array<i64: 24, 32>}]} {
    %c0_i32 = arith.constant 0 : i32
    %0 = arith.cmpi eq, %arg0, %c0_i32 : i32
    %1 = arith.extui %0 : i1 to i32
    %c0_i32_0 = arith.constant 0 : i32
    %2 = arith.cmpi ne, %1, %c0_i32_0 : i32
    scf.if %2 {
      %c0_51 = arith.constant 0 : index
      %c0_52 = arith.constant 0 : index
      %91 = vector.load %arg1[%c0_51, %c0_52] : memref<16x32xf32, #tpu.memory_space<vmem>>, vector<16x32xf32>
      %c0_53 = arith.constant 0 : index
      %c0_54 = arith.constant 0 : index
      %92 = vector.load %arg3[%c0_53, %c0_54] : memref<16x8xf32, #tpu.memory_space<vmem>>, vector<16x8xf32>
      %c0_55 = arith.constant 0 : index
      %c0_56 = arith.constant 0 : index
      %93 = vector.load %arg4[%c0_55, %c0_56] : memref<8x32xf32, #tpu.memory_space<vmem>>, vector<8x32xf32>
      %cst_57 = arith.constant dense<0.000000e+00> : vector<16x32xf32>
      %94 = tpu.matmul %92, %93, %cst_57 {dimension_numbers = #tpu.dot_dimension_numbers<[1], [0], [0], [1], [0, 0, 1, 1], [], []>} : vector<16x8xf32>, vector<8x32xf32>, vector<16x32xf32> -> vector<16x32xf32>
      %95 = arith.addf %91, %94 : vector<16x32xf32>
      %c0_58 = arith.constant 0 : index
      %c0_59 = arith.constant 0 : index
      %96 = vector.load %arg5[%c0_58, %c0_59] : memref<1x32xf32, #tpu.memory_space<vmem>>, vector<1x32xf32>
      %97 = vector.broadcast %96 : vector<1x32xf32> to vector<16x32xf32>
      %98 = arith.addf %95, %97 : vector<16x32xf32>
      %c0_60 = arith.constant 0 : index
      %c0_61 = arith.constant 0 : index
      %99 = vector.load %arg14[%c0_60, %c0_61] : memref<16x32xf32, #tpu.memory_space<vmem>>, vector<16x32xf32>
      tpu.vector_store %arg14[%c0_60, %c0_61], %98 {strides = array<i32>} : memref<16x32xf32, #tpu.memory_space<vmem>>, vector<16x32xf32>,
      %c0_62 = arith.constant 0 : index
      %c0_63 = arith.constant 0 : index
      %100 = vector.load %arg2[%c0_62, %c0_63] : memref<24x32xf32, #tpu.memory_space<vmem>>, vector<24x32xf32>
      %c0_64 = arith.constant 0 : index
      %c0_65 = arith.constant 0 : index
      %101 = vector.load %arg15[%c0_64, %c0_65] : memref<24x32xf32, #tpu.memory_space<vmem>>, vector<24x32xf32>
      tpu.vector_store %arg15[%c0_64, %c0_65], %100 {strides = array<i32>} : memref<24x32xf32, #tpu.memory_space<vmem>>, vector<24x32xf32>,
    } else {
    }
    %c0 = arith.constant 0 : index
    %c0_1 = arith.constant 0 : index
    %3 = vector.load %arg14[%c0, %c0_1] : memref<16x32xf32, #tpu.memory_space<vmem>>, vector<16x32xf32>
    %c0_2 = arith.constant 0 : index
    %c0_3 = arith.constant 0 : index
    %4 = vector.load %arg15[%c0_2, %c0_3] : memref<24x32xf32, #tpu.memory_space<vmem>>, vector<24x32xf32>
    %c0_4 = arith.constant 0 : index
    %c0_5 = arith.constant 0 : index
    %5 = vector.load %arg6[%c0_4, %c0_5] : memref<24x16xf32, #tpu.memory_space<vmem>>, vector<24x16xf32>
    %cst = arith.constant dense<0.000000e+00> : vector<24x32xf32>
    %6 = tpu.matmul %5, %3, %cst {dimension_numbers = #tpu.dot_dimension_numbers<[1], [0], [0], [1], [0, 0, 1, 1], [], []>} : vector<24x16xf32>, vector<16x32xf32>, vector<24x32xf32> -> vector<24x32xf32>
    %7 = tpu.concatenate %6, %4 in 1 : vector<24x32xf32>, vector<24x32xf32> -> vector<24x64xf32>
    %c0_6 = arith.constant 0 : index
    %c0_7 = arith.constant 0 : index
    %c0_8 = arith.constant 0 : index
    %8 = vector.load %arg7[%c0_6, %c0_7, %c0_8] : memref<1x64x32xf32, #tpu.memory_space<vmem>>, vector<1x64x32xf32>
    %9 = vector.shape_cast %8 : vector<1x64x32xf32> to vector<64x32xf32>
    %cst_9 = arith.constant dense<0.000000e+00> : vector<24x32xf32>
    %10 = tpu.matmul %7, %9, %cst_9 {dimension_numbers = #tpu.dot_dimension_numbers<[1], [0], [0], [1], [0, 0, 1, 1], [], []>} : vector<24x64xf32>, vector<64x32xf32>, vector<24x32xf32> -> vector<24x32xf32>
    %c0_10 = arith.constant 0 : index
    %c0_11 = arith.constant 0 : index
    %c0_12 = arith.constant 0 : index
    %11 = vector.load %arg8[%c0_10, %c0_11, %c0_12] : memref<1x1x32xf32, #tpu.memory_space<vmem>>, vector<1x1x32xf32>
    %12 = vector.shape_cast %11 : vector<1x1x32xf32> to vector<1x32xf32>
    %13 = vector.broadcast %12 : vector<1x32xf32> to vector<24x32xf32>
    %14 = arith.addf %10, %13 : vector<24x32xf32>
    %c0_13 = arith.constant 0 : index
    %c0_14 = arith.constant 0 : index
    %15 = vector.load %arg9[%c0_13, %c0_14] : memref<16x24xf32, #tpu.memory_space<vmem>>, vector<16x24xf32>
    %cst_15 = arith.constant dense<0.000000e+00> : vector<16x32xf32>
    %16 = tpu.matmul %15, %4, %cst_15 {dimension_numbers = #tpu.dot_dimension_numbers<[1], [0], [0], [1], [0, 0, 1, 1], [], []>} : vector<16x24xf32>, vector<24x32xf32>, vector<16x32xf32> -> vector<16x32xf32>
    %17 = tpu.concatenate %16, %3 in 1 : vector<16x32xf32>, vector<16x32xf32> -> vector<16x64xf32>
    %c0_16 = arith.constant 0 : index
    %c0_17 = arith.constant 0 : index
    %c0_18 = arith.constant 0 : index
    %18 = vector.load %arg10[%c0_16, %c0_17, %c0_18] : memref<1x64x32xf32, #tpu.memory_space<vmem>>, vector<1x64x32xf32>
    %19 = vector.shape_cast %18 : vector<1x64x32xf32> to vector<64x32xf32>
    %cst_19 = arith.constant dense<0.000000e+00> : vector<16x32xf32>
    %20 = tpu.matmul %17, %19, %cst_19 {dimension_numbers = #tpu.dot_dimension_numbers<[1], [0], [0], [1], [0, 0, 1, 1], [], []>} : vector<16x64xf32>, vector<64x32xf32>, vector<16x32xf32> -> vector<16x32xf32>
    %c0_20 = arith.constant 0 : index
    %c0_21 = arith.constant 0 : index
    %c0_22 = arith.constant 0 : index
    %21 = vector.load %arg11[%c0_20, %c0_21, %c0_22] : memref<1x1x32xf32, #tpu.memory_space<vmem>>, vector<1x1x32xf32>
    %22 = vector.shape_cast %21 : vector<1x1x32xf32> to vector<1x32xf32>
    %23 = vector.broadcast %22 : vector<1x32xf32> to vector<16x32xf32>
    %24 = arith.addf %20, %23 : vector<16x32xf32>
    %c0_23 = arith.constant 0 : index
    %c0_24 = arith.constant 0 : index
    %c0_25 = arith.constant 0 : index
    %25 = vector.load %arg12[%c0_23, %c0_24, %c0_25] : memref<1x1x32xf32, #tpu.memory_space<vmem>>, vector<1x1x32xf32>
    %26 = vector.shape_cast %25 : vector<1x1x32xf32> to vector<1x32xf32>
    %c0_26 = arith.constant 0 : index
    %c0_27 = arith.constant 0 : index
    %c0_28 = arith.constant 0 : index
    %27 = vector.load %arg13[%c0_26, %c0_27, %c0_28] : memref<1x1x32xf32, #tpu.memory_space<vmem>>, vector<1x1x32xf32>
    %28 = vector.shape_cast %27 : vector<1x1x32xf32> to vector<1x32xf32>
    %cst_29 = arith.constant 1.000000e+00 : f32
    %29 = vector.broadcast %cst_29 : f32 to vector<16x32xf32>
    %30 = arith.mulf %24, %29 : vector<16x32xf32>
    %cst_30 = arith.constant 5.000000e-01 : f32
    %31 = vector.broadcast %cst_30 : f32 to vector<16x32xf32>
    %32 = arith.mulf %31, %30 : vector<16x32xf32>
    %cst_31 = arith.constant 0.707106769 : f32
    %33 = vector.broadcast %cst_31 : f32 to vector<16x32xf32>
    %34 = arith.mulf %30, %33 : vector<16x32xf32>
    %35 = math.erf %34 : vector<16x32xf32>
    %cst_32 = arith.constant 1.000000e+00 : f32
    %36 = vector.broadcast %cst_32 : f32 to vector<16x32xf32>
    %37 = arith.addf %36, %35 : vector<16x32xf32>
    %38 = arith.mulf %32, %37 : vector<16x32xf32>
    %cst_33 = arith.constant dense<0.000000e+00> : vector<16xf32>
    %39 = vector.multi_reduction <add>, %38, %cst_33 [1] : vector<16x32xf32> to vector<16xf32>
    %40 = vector.shape_cast %39 : vector<16xf32> to vector<16x1xf32>
    %cst_34 = arith.constant 3.200000e+01 : f32
    %41 = vector.broadcast %cst_34 : f32 to vector<16x1xf32>
    %42 = arith.divf %40, %41 : vector<16x1xf32>
    %43 = vector.broadcast %42 : vector<16x1xf32> to vector<16x32xf32>
    %44 = arith.subf %38, %43 : vector<16x32xf32>
    %45 = arith.mulf %44, %44 : vector<16x32xf32>
    %cst_35 = arith.constant dense<0.000000e+00> : vector<16xf32>
    %46 = vector.multi_reduction <add>, %45, %cst_35 [1] : vector<16x32xf32> to vector<16xf32>
    %47 = vector.shape_cast %46 : vector<16xf32> to vector<16x1xf32>
    %cst_36 = arith.constant 3.200000e+01 : f32
    %48 = vector.broadcast %cst_36 : f32 to vector<16x1xf32>
    %49 = arith.divf %47, %48 : vector<16x1xf32>
    %cst_37 = arith.constant 9.99999974E-6 : f32
    %50 = vector.broadcast %cst_37 : f32 to vector<16x1xf32>
    %51 = arith.addf %49, %50 : vector<16x1xf32>
    %52 = math.rsqrt %51 : vector<16x1xf32>
    %53 = vector.broadcast %52 : vector<16x1xf32> to vector<16x32xf32>
    %54 = arith.mulf %44, %53 : vector<16x32xf32>
    %55 = vector.broadcast %26 : vector<1x32xf32> to vector<16x32xf32>
    %56 = arith.mulf %54, %55 : vector<16x32xf32>
    %57 = vector.broadcast %28 : vector<1x32xf32> to vector<16x32xf32>
    %58 = arith.addf %56, %57 : vector<16x32xf32>
    %c0_38 = arith.constant 0 : index
    %c0_39 = arith.constant 0 : index
    %59 = vector.load %arg14[%c0_38, %c0_39] : memref<16x32xf32, #tpu.memory_space<vmem>>, vector<16x32xf32>
    tpu.vector_store %arg14[%c0_38, %c0_39], %58 {strides = array<i32>} : memref<16x32xf32, #tpu.memory_space<vmem>>, vector<16x32xf32>,
    %cst_40 = arith.constant 1.000000e+00 : f32
    %60 = vector.broadcast %cst_40 : f32 to vector<24x32xf32>
    %61 = arith.mulf %14, %60 : vector<24x32xf32>
    %cst_41 = arith.constant 5.000000e-01 : f32
    %62 = vector.broadcast %cst_41 : f32 to vector<24x32xf32>
    %63 = arith.mulf %62, %61 : vector<24x32xf32>
    %cst_42 = arith.constant 0.707106769 : f32
    %64 = vector.broadcast %cst_42 : f32 to vector<24x32xf32>
    %65 = arith.mulf %61, %64 : vector<24x32xf32>
    %66 = math.erf %65 : vector<24x32xf32>
    %cst_43 = arith.constant 1.000000e+00 : f32
    %67 = vector.broadcast %cst_43 : f32 to vector<24x32xf32>
    %68 = arith.addf %67, %66 : vector<24x32xf32>
    %69 = arith.mulf %63, %68 : vector<24x32xf32>
    %cst_44 = arith.constant dense<0.000000e+00> : vector<24xf32>
    %70 = vector.multi_reduction <add>, %69, %cst_44 [1] : vector<24x32xf32> to vector<24xf32>
    %71 = vector.shape_cast %70 : vector<24xf32> to vector<24x1xf32>
    %cst_45 = arith.constant 3.200000e+01 : f32
    %72 = vector.broadcast %cst_45 : f32 to vector<24x1xf32>
    %73 = arith.divf %71, %72 : vector<24x1xf32>
    %74 = vector.broadcast %73 : vector<24x1xf32> to vector<24x32xf32>
    %75 = arith.subf %69, %74 : vector<24x32xf32>
    %76 = arith.mulf %75, %75 : vector<24x32xf32>
    %cst_46 = arith.constant dense<0.000000e+00> : vector<24xf32>
    %77 = vector.multi_reduction <add>, %76, %cst_46 [1] : vector<24x32xf32> to vector<24xf32>
    %78 = vector.shape_cast %77 : vector<24xf32> to vector<24x1xf32>
    %cst_47 = arith.constant 3.200000e+01 : f32
    %79 = vector.broadcast %cst_47 : f32 to vector<24x1xf32>
    %80 = arith.divf %78, %79 : vector<24x1xf32>
    %cst_48 = arith.constant 9.99999974E-6 : f32
    %81 = vector.broadcast %cst_48 : f32 to vector<24x1xf32>
    %82 = arith.addf %80, %81 : vector<24x1xf32>
    %83 = math.rsqrt %82 : vector<24x1xf32>
    %84 = vector.broadcast %83 : vector<24x1xf32> to vector<24x32xf32>
    %85 = arith.mulf %75, %84 : vector<24x32xf32>
    %86 = vector.broadcast %26 : vector<1x32xf32> to vector<24x32xf32>
    %87 = arith.mulf %85, %86 : vector<24x32xf32>
    %88 = vector.broadcast %28 : vector<1x32xf32> to vector<24x32xf32>
    %89 = arith.addf %87, %88 : vector<24x32xf32>
    %c0_49 = arith.constant 0 : index
    %c0_50 = arith.constant 0 : index
    %90 = vector.load %arg15[%c0_49, %c0_50] : memref<24x32xf32, #tpu.memory_space<vmem>>, vector<24x32xf32>
    tpu.vector_store %arg15[%c0_49, %c0_50], %89 {strides = array<i32>} : memref<24x32xf32, #tpu.memory_space<vmem>>, vector<24x32xf32>,
    return
  }
  func.func @transform_0(%arg0: i32) -> (i32, i32) {
    %c0_i32 = arith.constant 0 : i32
    %c0_i32_0 = arith.constant 0 : i32
    %c0_i32_1 = arith.constant 0 : i32
    return %c0_i32, %c0_i32_0 : i32, i32
  }
  func.func @transform_1(%arg0: i32) -> (i32, i32) {
    %c0_i32 = arith.constant 0 : i32
    %c0_i32_0 = arith.constant 0 : i32
    %c0_i32_1 = arith.constant 0 : i32
    return %c0_i32, %c0_i32_0 : i32, i32
  }
  func.func @transform_2(%arg0: i32) -> (i32, i32) {
    %c0_i32 = arith.constant 0 : i32
    %c0_i32_0 = arith.constant 0 : i32
    %c0_i32_1 = arith.constant 0 : i32
    return %c0_i32, %c0_i32_0 : i32, i32
  }
  func.func @transform_3(%arg0: i32) -> (i32, i32) {
    %c0_i32 = arith.constant 0 : i32
    %c0_i32_0 = arith.constant 0 : i32
    %c0_i32_1 = arith.constant 0 : i32
    return %c0_i32, %c0_i32_0 : i32, i32
  }
  func.func @transform_4(%arg0: i32) -> (i32, i32) {
    %c0_i32 = arith.constant 0 : i32
    %c0_i32_0 = arith.constant 0 : i32
    %c0_i32_1 = arith.constant 0 : i32
    return %c0_i32, %c0_i32_0 : i32, i32
  }
  func.func @transform_5(%arg0: i32) -> (i32, i32) {
    %c0_i32 = arith.constant 0 : i32
    %c0_i32_0 = arith.constant 0 : i32
    %c0_i32_1 = arith.constant 0 : i32
    return %c0_i32, %c0_i32_0 : i32, i32
  }
  func.func @transform_6(%arg0: i32) -> (i32, i32, i32) {
    %c0_i32 = arith.constant 0 : i32
    %c0_i32_0 = arith.constant 0 : i32
    %c0_i32_1 = arith.constant 0 : i32
    return %arg0, %c0_i32, %c0_i32_0 : i32, i32, i32
  }
  func.func @transform_7(%arg0: i32) -> (i32, i32, i32) {
    %c0_i32 = arith.constant 0 : i32
    %c0_i32_0 = arith.constant 0 : i32
    %c0_i32_1 = arith.constant 0 : i32
    return %arg0, %c0_i32, %c0_i32_0 : i32, i32, i32
  }
  func.func @transform_8(%arg0: i32) -> (i32, i32) {
    %c0_i32 = arith.constant 0 : i32
    %c0_i32_0 = arith.constant 0 : i32
    %c0_i32_1 = arith.constant 0 : i32
    return %c0_i32, %c0_i32_0 : i32, i32
  }
  func.func @transform_9(%arg0: i32) -> (i32, i32, i32) {
    %c0_i32 = arith.constant 0 : i32
    %c0_i32_0 = arith.constant 0 : i32
    %c0_i32_1 = arith.constant 0 : i32
    return %arg0, %c0_i32, %c0_i32_0 : i32, i32, i32
  }
  func.func @transform_10(%arg0: i32) -> (i32, i32, i32) {
    %c0_i32 = arith.constant 0 : i32
    %c0_i32_0 = arith.constant 0 : i32
    %c0_i32_1 = arith.constant 0 : i32
    return %arg0, %c0_i32, %c0_i32_0 : i32, i32, i32
  }
  func.func @transform_11(%arg0: i32) -> (i32, i32, i32) {
    %c0_i32 = arith.constant 0 : i32
    %c0_i32_0 = arith.constant 0 : i32
    %c0_i32_1 = arith.constant 0 : i32
    return %arg0, %c0_i32, %c0_i32_0 : i32, i32, i32
  }
  func.func @transform_12(%arg0: i32) -> (i32, i32, i32) {
    %c0_i32 = arith.constant 0 : i32
    %c0_i32_0 = arith.constant 0 : i32
    %c0_i32_1 = arith.constant 0 : i32
    return %arg0, %c0_i32, %c0_i32_0 : i32, i32, i32
  }
  func.func @transform_13(%arg0: i32) -> (i32, i32) {
    %c0_i32 = arith.constant 0 : i32
    %c0_i32_0 = arith.constant 0 : i32
    %c0_i32_1 = arith.constant 0 : i32
    return %c0_i32, %c0_i32_0 : i32, i32
  }
  func.func @transform_14(%arg0: i32) -> (i32, i32) {
    %c0_i32 = arith.constant 0 : i32
    %c0_i32_0 = arith.constant 0 : i32
    %c0_i32_1 = arith.constant 0 : i32
    return %c0_i32, %c0_i32_0 : i32, i32
  }
}

</mosaic_0001>

<llo_original>
// kernel: tpu_custom_call.1
$region0: #{tpu_custom_call.1}
  #allocation0 [shape = 'u32[]', space=smem, size = 0x4, offset = 0x4, fixed_abs, tag = 'smem constant byte address 0x4 - core index']
  #allocation1 [shape = 'u32[144,128]{1,0:T(1,128)}', space=vmem, size = 0x12000, scoped, tag = 'internal scratch']
  %s0 = inlined_call_operand.vmem [shape: f32[16,32], index: 0, kind: input, shape index: {}]
  %s1 = inlined_call_operand.vmem [shape: f32[24,32], index: 1, kind: input, shape index: {}]
  %s2 = inlined_call_operand.vmem [shape: f32[16,8], index: 2, kind: input, shape index: {}]
  %s3 = inlined_call_operand.vmem [shape: f32[8,32], index: 3, kind: input, shape index: {}]
  %s4 = inlined_call_operand.vmem [shape: f32[1,32], index: 4, kind: input, shape index: {}]
  %s5 = inlined_call_operand.vmem [shape: f32[24,16], index: 5, kind: input, shape index: {}]
  %s6 = inlined_call_operand.vmem [shape: f32[3,64,32], index: 6, kind: input, shape index: {}]
  %s7 = inlined_call_operand.vmem [shape: f32[3,1,32], index: 7, kind: input, shape index: {}]
  %s8 = inlined_call_operand.vmem [shape: f32[16,24], index: 8, kind: input, shape index: {}]
  %s9 = inlined_call_operand.vmem [shape: f32[3,64,32], index: 9, kind: input, shape index: {}]
  %s10 = inlined_call_operand.vmem [shape: f32[3,1,32], index: 10, kind: input, shape index: {}]
  %s11 = inlined_call_operand.vmem [shape: f32[3,1,32], index: 11, kind: input, shape index: {}]
  %s12 = inlined_call_operand.vmem [shape: f32[3,1,32], index: 12, kind: input, shape index: {}]
  %s13 = inlined_call_operand.hbm [shape: f32[16,32], index: 13, kind: output, shape index: {0}]
  %s14 = inlined_call_operand.hbm [shape: f32[24,32], index: 14, kind: output, shape index: {1}]
  %15 = xla_tuple %s13, %s14
  %s16 = sld [smem:[#allocation0]]
  $region97: #{tpu_custom_call.1} parent=0
    _
  %s18 = ssub.s32 1, %s16
  %s19 = scalar_select 0, %s18, %s16
  $region1: #{tpu_custom_call.1} parent=0
    #allocation2 [shape = 'u8[8192]{0}', space=vmem, size = 0x2000, scoped, tag = 'output window, operand 0, single buffered']
    #allocation3 [shape = 's32[2]{0}', space=sflag, size = 0x8, scoped, tag = 'scoped memory for tpu_custom_call.1']
    #allocation4 [shape = 'u8[12288]{0}', space=vmem, size = 0x3000, scoped, tag = 'output window, operand 1, single buffered']
    #allocation5 [shape = 's32[1]{0}', space=sflag, size = 0x4, scoped, tag = 'scoped memory for tpu_custom_call.1']
    %20 = vsyncpa [#allocation3], 0
    %21 = vsyncpa [#allocation5], 0
    loop: start=0, step=1, limit=5
    $region2: #{tpu_custom_call.1} parent=1 // loop_pre_header
      _
    $region3: #{tpu_custom_call.1} parent=1 // loop_header
      %s23 = sphi 0, %s27
      %p24 = scmp.ge.s32.totalorder %s23, 5
      %s31 = sphi 0, %s31
      %s33 = sphi 0, %s31
      %s34 = sphi 0, %s33
      %s48 = sphi 0, %s34
      %s52 = sphi 0, %s52
      %s54 = sphi 0, %s52
      %s55 = sphi 0, %s54
      %s69 = sphi 0, %s55
      %s73 = sphi 0, %s73
      %s75 = sphi 0, %s73
      %s76 = sphi 0, %s75
      %s90 = sphi 0, %s76
      %s94 = sphi 0, %s94
      %s96 = sphi 0, %s94
      %s97 = sphi 0, %s96
      %s111 = sphi 0, %s97
      %s115 = sphi 0, %s115
      %s117 = sphi 0, %s115
      %s118 = sphi 0, %s117
      %s132 = sphi 0, %s118
      %s136 = sphi 0, %s136
      %s138 = sphi 0, %s136
      %s139 = sphi 0, %s138
      %s153 = sphi 0, %s139
      %s159 = sphi 0, %s161
      %s162 = sphi 0, %s159
      %s163 = sphi 0, %s162
      %s179 = sphi 0, %s163
      %s185 = sphi 0, %s187
      %s188 = sphi 0, %s185
      %s189 = sphi 0, %s188
      %s205 = sphi 0, %s189
      %s209 = sphi 0, %s209
      %s211 = sphi 0, %s209
      %s212 = sphi 0, %s211
      %s226 = sphi 0, %s212
      %s232 = sphi 0, %s234
      %s235 = sphi 0, %s232
      %s236 = sphi 0, %s235
      %s252 = sphi 0, %s236
      %s258 = sphi 0, %s260
      %s261 = sphi 0, %s258
      %s262 = sphi 0, %s261
      %s278 = sphi 0, %s262
      %s284 = sphi 0, %s286
      %s287 = sphi 0, %s284
      %s288 = sphi 0, %s287
      %s304 = sphi 0, %s288
      %s310 = sphi 0, %s312
      %s313 = sphi 0, %s310
      %s314 = sphi 0, %s313
      %s330 = sphi 0, %s314
      %s334 = sphi 0, %s334
      %s336 = sphi 0, %s334
      %s337 = sphi 0, %s336
      %s351 = sphi 0, %s337
      %s355 = sphi 0, %s355
      %s357 = sphi 0, %s355
      %s358 = sphi 0, %s357
      %s372 = sphi 0, %s358
    $region4: #{tpu_custom_call.1} parent=1 // loop_header_branch
      %26 = sbr.rel (%p24) target = $region8
    $region5: #{tpu_custom_call.1} parent=1 // loop_body
      %s28 = ssub.s32 %s23, 1
      %s29 = ssub.s32 %s23, 2
      %s30 = sadd.s32 %s23, 1
      %s32 = sadd.s32 %s31, 1
      %p35 = scmp.eq.s32.totalorder %s23, 2
      %p36 = scmp.ne.s32.totalorder %s31, %s33
      %p37 = scmp.eq.s32.totalorder %s23, 0
      %p38 = por %p36, %p37
      %p39 = scmp.ne.s32.totalorder %s31, %s33
      %p40 = scmp.eq.s32.totalorder %s28, 2
      %p41 = por %p39, %p40
      %p42 = scmp.ne.s32.totalorder %s33, %s34
      %p43 = scmp.eq.s32.totalorder %s28, 0
      %p44 = por %p42, %p43
      %p45 = scmp.ne.s32.totalorder %s33, %s34
      %p46 = scmp.eq.s32.totalorder %s29, 2
      %p47 = por %p45, %p46
      %p49 = scmp.ne.s32.totalorder %s34, %s48
      %p50 = scmp.eq.s32.totalorder %s29, 0
      %p51 = por %p49, %p50
      %s53 = sadd.s32 %s52, 1
      %p56 = scmp.eq.s32.totalorder %s23, 2
      %p57 = scmp.ne.s32.totalorder %s52, %s54
      %p58 = scmp.eq.s32.totalorder %s23, 0
      %p59 = por %p57, %p58
      %p60 = scmp.ne.s32.totalorder %s52, %s54
      %p61 = scmp.eq.s32.totalorder %s28, 2
      %p62 = por %p60, %p61
      %p63 = scmp.ne.s32.totalorder %s54, %s55
      %p64 = scmp.eq.s32.totalorder %s28, 0
      %p65 = por %p63, %p64
      %p66 = scmp.ne.s32.totalorder %s54, %s55
      %p67 = scmp.eq.s32.totalorder %s29, 2
      %p68 = por %p66, %p67
      %p70 = scmp.ne.s32.totalorder %s55, %s69
      %p71 = scmp.eq.s32.totalorder %s29, 0
      %p72 = por %p70, %p71
      %s74 = sadd.s32 %s73, 1
      %p77 = scmp.eq.s32.totalorder %s23, 2
      %p78 = scmp.ne.s32.totalorder %s73, %s75
      %p79 = scmp.eq.s32.totalorder %s23, 0
      %p80 = por %p78, %p79
      %p81 = scmp.ne.s32.totalorder %s73, %s75
      %p82 = scmp.eq.s32.totalorder %s28, 2
      %p83 = por %p81, %p82
      %p84 = scmp.ne.s32.totalorder %s75, %s76
      %p85 = scmp.eq.s32.totalorder %s28, 0
      %p86 = por %p84, %p85
      %p87 = scmp.ne.s32.totalorder %s75, %s76
      %p88 = scmp.eq.s32.totalorder %s29, 2
      %p89 = por %p87, %p88
      %p91 = scmp.ne.s32.totalorder %s76, %s90
      %p92 = scmp.eq.s32.totalorder %s29, 0
      %p93 = por %p91, %p92
      %s95 = sadd.s32 %s94, 1
      %p98 = scmp.eq.s32.totalorder %s23, 2
      %p99 = scmp.ne.s32.totalorder %s94, %s96
      %p100 = scmp.eq.s32.totalorder %s23, 0
      %p101 = por %p99, %p100
      %p102 = scmp.ne.s32.totalorder %s94, %s96
      %p103 = scmp.eq.s32.totalorder %s28, 2
      %p104 = por %p102, %p103
      %p105 = scmp.ne.s32.totalorder %s96, %s97
      %p106 = scmp.eq.s32.totalorder %s28, 0
      %p107 = por %p105, %p106
      %p108 = scmp.ne.s32.totalorder %s96, %s97
      %p109 = scmp.eq.s32.totalorder %s29, 2
      %p110 = por %p108, %p109
      %p112 = scmp.ne.s32.totalorder %s97, %s111
      %p113 = scmp.eq.s32.totalorder %s29, 0
      %p114 = por %p112, %p113
      %s116 = sadd.s32 %s115, 1
      %p119 = scmp.eq.s32.totalorder %s23, 2
      %p120 = scmp.ne.s32.totalorder %s115, %s117
      %p121 = scmp.eq.s32.totalorder %s23, 0
      %p122 = por %p120, %p121
      %p123 = scmp.ne.s32.totalorder %s115, %s117
      %p124 = scmp.eq.s32.totalorder %s28, 2
      %p125 = por %p123, %p124
      %p126 = scmp.ne.s32.totalorder %s117, %s118
      %p127 = scmp.eq.s32.totalorder %s28, 0
      %p128 = por %p126, %p127
      %p129 = scmp.ne.s32.totalorder %s117, %s118
      %p130 = scmp.eq.s32.totalorder %s29, 2
      %p131 = por %p129, %p130
      %p133 = scmp.ne.s32.totalorder %s118, %s132
      %p134 = scmp.eq.s32.totalorder %s29, 0
      %p135 = por %p133, %p134
      %s137 = sadd.s32 %s136, 1
      %p140 = scmp.eq.s32.totalorder %s23, 2
      %p141 = scmp.ne.s32.totalorder %s136, %s138
      %p142 = scmp.eq.s32.totalorder %s23, 0
      %p143 = por %p141, %p142
      %p144 = scmp.ne.s32.totalorder %s136, %s138
      %p145 = scmp.eq.s32.totalorder %s28, 2
      %p146 = por %p144, %p145
      %p147 = scmp.ne.s32.totalorder %s138, %s139
      %p148 = scmp.eq.s32.totalorder %s28, 0
      %p149 = por %p147, %p148
      %p150 = scmp.ne.s32.totalorder %s138, %s139
      %p151 = scmp.eq.s32.totalorder %s29, 2
      %p152 = por %p150, %p151
      %p154 = scmp.ne.s32.totalorder %s139, %s153
      %p155 = scmp.eq.s32.totalorder %s29, 0
      %p156 = por %p154, %p155
      %s157 = ssub.s32 %s23, %s30
      %p158 = scmp.eq.s32.totalorder %s157, 0
      %s160 = sadd.s32 %s159, 1
      %s161 = scalar_select %p158, %s159, %s160
      %p164 = pneg %p158
      %p165 = scmp.eq.s32.totalorder %s23, 2
      %p166 = por %p164, %p165
      %p167 = scmp.ne.s32.totalorder %s159, %s162
      %p168 = scmp.eq.s32.totalorder %s23, 0
      %p169 = por %p167, %p168
      %p170 = scmp.ne.s32.totalorder %s159, %s162
      %p171 = scmp.eq.s32.totalorder %s28, 2
      %p172 = por %p170, %p171
      %p173 = scmp.ne.s32.totalorder %s162, %s163
      %p174 = scmp.eq.s32.totalorder %s28, 0
      %p175 = por %p173, %p174
      %p176 = scmp.ne.s32.totalorder %s162, %s163
      %p177 = scmp.eq.s32.totalorder %s29, 2
      %p178 = por %p176, %p177
      %p180 = scmp.ne.s32.totalorder %s163, %s179
      %p181 = scmp.eq.s32.totalorder %s29, 0
      %p182 = por %p180, %p181
      %s183 = ssub.s32 %s23, %s30
      %p184 = scmp.eq.s32.totalorder %s183, 0
      %s186 = sadd.s32 %s185, 1
      %s187 = scalar_select %p184, %s185, %s186
      %p190 = pneg %p184
      %p191 = scmp.eq.s32.totalorder %s23, 2
      %p192 = por %p190, %p191
      %p193 = scmp.ne.s32.totalorder %s185, %s188
      %p194 = scmp.eq.s32.totalorder %s23, 0
      %p195 = por %p193, %p194
      %p196 = scmp.ne.s32.totalorder %s185, %s188
      %p197 = scmp.eq.s32.totalorder %s28, 2
      %p198 = por %p196, %p197
      %p199 = scmp.ne.s32.totalorder %s188, %s189
      %p200 = scmp.eq.s32.totalorder %s28, 0
      %p201 = por %p199, %p200
      %p202 = scmp.ne.s32.totalorder %s188, %s189
      %p203 = scmp.eq.s32.totalorder %s29, 2
      %p204 = por %p202, %p203
      %p206 = scmp.ne.s32.totalorder %s189, %s205
      %p207 = scmp.eq.s32.totalorder %s29, 0
      %p208 = por %p206, %p207
      %s210 = sadd.s32 %s209, 1
      %p213 = scmp.eq.s32.totalorder %s23, 2
      %p214 = scmp.ne.s32.totalorder %s209, %s211
      %p215 = scmp.eq.s32.totalorder %s23, 0
      %p216 = por %p214, %p215
      %p217 = scmp.ne.s32.totalorder %s209, %s211
      %p218 = scmp.eq.s32.totalorder %s28, 2
      %p219 = por %p217, %p218
      %p220 = scmp.ne.s32.totalorder %s211, %s212
      %p221 = scmp.eq.s32.totalorder %s28, 0
      %p222 = por %p220, %p221
      %p223 = scmp.ne.s32.totalorder %s211, %s212
      %p224 = scmp.eq.s32.totalorder %s29, 2
      %p225 = por %p223, %p224
      %p227 = scmp.ne.s32.totalorder %s212, %s226
      %p228 = scmp.eq.s32.totalorder %s29, 0
      %p229 = por %p227, %p228
      %s230 = ssub.s32 %s23, %s30
      %p231 = scmp.eq.s32.totalorder %s230, 0
      %s233 = sadd.s32 %s232, 1
      %s234 = scalar_select %p231, %s232, %s233
      %p237 = pneg %p231
      %p238 = scmp.eq.s32.totalorder %s23, 2
      %p239 = por %p237, %p238
      %p240 = scmp.ne.s32.totalorder %s232, %s235
      %p241 = scmp.eq.s32.totalorder %s23, 0
      %p242 = por %p240, %p241
      %p243 = scmp.ne.s32.totalorder %s232, %s235
      %p244 = scmp.eq.s32.totalorder %s28, 2
      %p245 = por %p243, %p244
      %p246 = scmp.ne.s32.totalorder %s235, %s236
      %p247 = scmp.eq.s32.totalorder %s28, 0
      %p248 = por %p246, %p247
      %p249 = scmp.ne.s32.totalorder %s235, %s236
      %p250 = scmp.eq.s32.totalorder %s29, 2
      %p251 = por %p249, %p250
      %p253 = scmp.ne.s32.totalorder %s236, %s252
      %p254 = scmp.eq.s32.totalorder %s29, 0
      %p255 = por %p253, %p254
      %s256 = ssub.s32 %s23, %s30
      %p257 = scmp.eq.s32.totalorder %s256, 0
      %s259 = sadd.s32 %s258, 1
      %s260 = scalar_select %p257, %s258, %s259
      %p263 = pneg %p257
      %p264 = scmp.eq.s32.totalorder %s23, 2
      %p265 = por %p263, %p264
      %p266 = scmp.ne.s32.totalorder %s258, %s261
      %p267 = scmp.eq.s32.totalorder %s23, 0
      %p268 = por %p266, %p267
      %p269 = scmp.ne.s32.totalorder %s258, %s261
      %p270 = scmp.eq.s32.totalorder %s28, 2
      %p271 = por %p269, %p270
      %p272 = scmp.ne.s32.totalorder %s261, %s262
      %p273 = scmp.eq.s32.totalorder %s28, 0
      %p274 = por %p272, %p273
      %p275 = scmp.ne.s32.totalorder %s261, %s262
      %p276 = scmp.eq.s32.totalorder %s29, 2
      %p277 = por %p275, %p276
      %p279 = scmp.ne.s32.totalorder %s262, %s278
      %p280 = scmp.eq.s32.totalorder %s29, 0
      %p281 = por %p279, %p280
      %s282 = ssub.s32 %s23, %s30
      %p283 = scmp.eq.s32.totalorder %s282, 0
      %s285 = sadd.s32 %s284, 1
      %s286 = scalar_select %p283, %s284, %s285
      %p289 = pneg %p283
      %p290 = scmp.eq.s32.totalorder %s23, 2
      %p291 = por %p289, %p290
      %p292 = scmp.ne.s32.totalorder %s284, %s287
      %p293 = scmp.eq.s32.totalorder %s23, 0
      %p294 = por %p292, %p293
      %p295 = scmp.ne.s32.totalorder %s284, %s287
      %p296 = scmp.eq.s32.totalorder %s28, 2
      %p297 = por %p295, %p296
      %p298 = scmp.ne.s32.totalorder %s287, %s288
      %p299 = scmp.eq.s32.totalorder %s28, 0
      %p300 = por %p298, %p299
      %p301 = scmp.ne.s32.totalorder %s287, %s288
      %p302 = scmp.eq.s32.totalorder %s29, 2
      %p303 = por %p301, %p302
      %p305 = scmp.ne.s32.totalorder %s288, %s304
      %p306 = scmp.eq.s32.totalorder %s29, 0
      %p307 = por %p305, %p306
      %s308 = ssub.s32 %s23, %s30
      %p309 = scmp.eq.s32.totalorder %s308, 0
      %s311 = sadd.s32 %s310, 1
      %s312 = scalar_select %p309, %s310, %s311
      %p315 = pneg %p309
      %p316 = scmp.eq.s32.totalorder %s23, 2
      %p317 = por %p315, %p316
      %p318 = scmp.ne.s32.totalorder %s310, %s313
      %p319 = scmp.eq.s32.totalorder %s23, 0
      %p320 = por %p318, %p319
      %p321 = scmp.ne.s32.totalorder %s310, %s313
      %p322 = scmp.eq.s32.totalorder %s28, 2
      %p323 = por %p321, %p322
      %p324 = scmp.ne.s32.totalorder %s313, %s314
      %p325 = scmp.eq.s32.totalorder %s28, 0
      %p326 = por %p324, %p325
      %p327 = scmp.ne.s32.totalorder %s313, %s314
      %p328 = scmp.eq.s32.totalorder %s29, 2
      %p329 = por %p327, %p328
      %p331 = scmp.ne.s32.totalorder %s314, %s330
      %p332 = scmp.eq.s32.totalorder %s29, 0
      %p333 = por %p331, %p332
      %s335 = sadd.s32 %s334, 1
      %p338 = scmp.eq.s32.totalorder %s23, 2
      %p339 = scmp.ne.s32.totalorder %s334, %s336
      %p340 = scmp.eq.s32.totalorder %s23, 0
      %p341 = por %p339, %p340
      %p342 = scmp.ne.s32.totalorder %s334, %s336
      %p343 = scmp.eq.s32.totalorder %s28, 2
      %p344 = por %p342, %p343
      %p345 = scmp.ne.s32.totalorder %s336, %s337
      %p346 = scmp.eq.s32.totalorder %s28, 0
      %p347 = por %p345, %p346
      %p348 = scmp.ne.s32.totalorder %s336, %s337
      %p349 = scmp.eq.s32.totalorder %s29, 2
      %p350 = por %p348, %p349
      %p352 = scmp.ne.s32.totalorder %s337, %s351
      %p353 = scmp.eq.s32.totalorder %s29, 0
      %p354 = por %p352, %p353
      %s356 = sadd.s32 %s355, 1
      %p359 = scmp.eq.s32.totalorder %s23, 2
      %p360 = scmp.ne.s32.totalorder %s355, %s357
      %p361 = scmp.eq.s32.totalorder %s23, 0
      %p362 = por %p360, %p361
      %p363 = scmp.ne.s32.totalorder %s355, %s357
      %p364 = scmp.eq.s32.totalorder %s28, 2
      %p365 = por %p363, %p364
      %p366 = scmp.ne.s32.totalorder %s357, %s358
      %p367 = scmp.eq.s32.totalorder %s28, 0
      %p368 = por %p366, %p367
      %p369 = scmp.ne.s32.totalorder %s357, %s358
      %p370 = scmp.eq.s32.totalorder %s29, 2
      %p371 = por %p369, %p370
      %p373 = scmp.ne.s32.totalorder %s358, %s372
      %p374 = scmp.eq.s32.totalorder %s29, 0
      %p375 = por %p373, %p374
      %p376 = scmp.le.s32.totalorder 1, %s23
      %p377 = scmp.lt.s32.totalorder %s23, 4
      %p378 = pnand %p376, %p377
      %p379 = pneg %p378
      // Predicated region
      $region9: #{tpu_custom_call.1} parent=5 // pred_check
        _
      $region10: #{tpu_custom_call.1} parent=5 // pred_check_branch
        %381 = sbr.rel (%p378) target = $region12
      $region11: #{tpu_custom_call.1} parent=5 // pred_region
        %s382 = ssub.s32 %s23, 1
        // Predicated region
        $region13: #{tpu_custom_call.1} parent=11 // pred_check
          %p383 = pneg %p44
        $region14: #{tpu_custom_call.1} parent=11 // pred_check_branch
          %385 = sbr.rel (%p383) target = $region16
        $region15: #{tpu_custom_call.1} parent=11 // pred_region
          _
        $region16: #{tpu_custom_call.1} parent=11 // pred_fallthru
          _
        // Predicated region
        $region17: #{tpu_custom_call.1} parent=11 // pred_check
          %p386 = pneg %p65
        $region18: #{tpu_custom_call.1} parent=11 // pred_check_branch
          %388 = sbr.rel (%p386) target = $region20
        $region19: #{tpu_custom_call.1} parent=11 // pred_region
          _
        $region20: #{tpu_custom_call.1} parent=11 // pred_fallthru
          _
        // Predicated region
        $region21: #{tpu_custom_call.1} parent=11 // pred_check
          %p389 = pneg %p86
        $region22: #{tpu_custom_call.1} parent=11 // pred_check_branch
          %391 = sbr.rel (%p389) target = $region24
        $region23: #{tpu_custom_call.1} parent=11 // pred_region
          _
        $region24: #{tpu_custom_call.1} parent=11 // pred_fallthru
          _
        // Predicated region
        $region25: #{tpu_custom_call.1} parent=11 // pred_check
          %p392 = pneg %p107
        $region26: #{tpu_custom_call.1} parent=11 // pred_check_branch
          %394 = sbr.rel (%p392) target = $region28
        $region27: #{tpu_custom_call.1} parent=11 // pred_region
          _
        $region28: #{tpu_custom_call.1} parent=11 // pred_fallthru
          _
        // Predicated region
        $region29: #{tpu_custom_call.1} parent=11 // pred_check
          %p395 = pneg %p128
        $region30: #{tpu_custom_call.1} parent=11 // pred_check_branch
          %397 = sbr.rel (%p395) target = $region32
        $region31: #{tpu_custom_call.1} parent=11 // pred_region
          _
        $region32: #{tpu_custom_call.1} parent=11 // pred_fallthru
          _
        // Predicated region
        $region33: #{tpu_custom_call.1} parent=11 // pred_check
          %p398 = pneg %p149
        $region34: #{tpu_custom_call.1} parent=11 // pred_check_branch
          %400 = sbr.rel (%p398) target = $region36
        $region35: #{tpu_custom_call.1} parent=11 // pred_region
          _
        $region36: #{tpu_custom_call.1} parent=11 // pred_fallthru
          _
        // Predicated region
        $region37: #{tpu_custom_call.1} parent=11 // pred_check
          %p401 = pneg %p222
        $region38: #{tpu_custom_call.1} parent=11 // pred_check_branch
          %403 = sbr.rel (%p401) target = $region40
        $region39: #{tpu_custom_call.1} parent=11 // pred_region
          _
        $region40: #{tpu_custom_call.1} parent=11 // pred_fallthru
          _
      $region12: #{tpu_custom_call.1} parent=5 // pred_fallthru
        _
      %p404 = scmp.lt.s32.totalorder %s23, 3
      // Predicated region
      $region41: #{tpu_custom_call.1} parent=5 // pred_check
        %p405 = pneg %p404
      $region42: #{tpu_custom_call.1} parent=5 // pred_check_branch
        %407 = sbr.rel (%p405) target = $region44
      $region43: #{tpu_custom_call.1} parent=5 // pred_region
        // Predicated region
        $region45: #{tpu_custom_call.1} parent=43 // pred_check
          %p408 = pneg %p169
        $region46: #{tpu_custom_call.1} parent=43 // pred_check_branch
          %410 = sbr.rel (%p408) target = $region48
        $region47: #{tpu_custom_call.1} parent=43 // pred_region
          %p411 = scmp.lt.s32.totalorder %s23, 2
          %s412 = scalar_select %p411, %s23, 2
          %s413 = smul.addr %s412, 8
          %s414 = smul.addr %s413, 8
          %s415 = scalar_lea.vmem %s6, %s414
        $region48: #{tpu_custom_call.1} parent=43 // pred_fallthru
          _
        // Predicated region
        $region49: #{tpu_custom_call.1} parent=43 // pred_check
          %p416 = pneg %p195
        $region50: #{tpu_custom_call.1} parent=43 // pred_check_branch
          %418 = sbr.rel (%p416) target = $region52
        $region51: #{tpu_custom_call.1} parent=43 // pred_region
          %p419 = scmp.lt.s32.totalorder %s23, 2
          %s420 = scalar_select %p419, %s23, 2
          %s421 = scalar_lea.vmem %s7, %s420
        $region52: #{tpu_custom_call.1} parent=43 // pred_fallthru
          _
        // Predicated region
        $region53: #{tpu_custom_call.1} parent=43 // pred_check
          %p422 = pneg %p242
        $region54: #{tpu_custom_call.1} parent=43 // pred_check_branch
          %424 = sbr.rel (%p422) target = $region56
        $region55: #{tpu_custom_call.1} parent=43 // pred_region
          %p425 = scmp.lt.s32.totalorder %s23, 2
          %s426 = scalar_select %p425, %s23, 2
          %s427 = smul.addr %s426, 8
          %s428 = smul.addr %s427, 8
          %s429 = scalar_lea.vmem %s9, %s428
        $region56: #{tpu_custom_call.1} parent=43 // pred_fallthru
          _
        // Predicated region
        $region57: #{tpu_custom_call.1} parent=43 // pred_check
          %p430 = pneg %p268
        $region58: #{tpu_custom_call.1} parent=43 // pred_check_branch
          %432 = sbr.rel (%p430) target = $region60
        $region59: #{tpu_custom_call.1} parent=43 // pred_region
          %p433 = scmp.lt.s32.totalorder %s23, 2
          %s434 = scalar_select %p433, %s23, 2
          %s435 = scalar_lea.vmem %s10, %s434
        $region60: #{tpu_custom_call.1} parent=43 // pred_fallthru
          _
        // Predicated region
        $region61: #{tpu_custom_call.1} parent=43 // pred_check
          %p436 = pneg %p294
        $region62: #{tpu_custom_call.1} parent=43 // pred_check_branch
          %438 = sbr.rel (%p436) target = $region64
        $region63: #{tpu_custom_call.1} parent=43 // pred_region
          %p439 = scmp.lt.s32.totalorder %s23, 2
          %s440 = scalar_select %p439, %s23, 2
          %s441 = scalar_lea.vmem %s11, %s440
        $region64: #{tpu_custom_call.1} parent=43 // pred_fallthru
          _
        // Predicated region
        $region65: #{tpu_custom_call.1} parent=43 // pred_check
          %p442 = pneg %p320
        $region66: #{tpu_custom_call.1} parent=43 // pred_check_branch
          %444 = sbr.rel (%p442) target = $region68
        $region67: #{tpu_custom_call.1} parent=43 // pred_region
          %p445 = scmp.lt.s32.totalorder %s23, 2
          %s446 = scalar_select %p445, %s23, 2
          %s447 = scalar_lea.vmem %s12, %s446
        $region68: #{tpu_custom_call.1} parent=43 // pred_fallthru
          _
      $region44: #{tpu_custom_call.1} parent=5 // pred_fallthru
        _
      %p448 = scmp.le.s32.totalorder 1, %s23
      %p449 = scmp.lt.s32.totalorder %s23, 4
      %p450 = pnand %p448, %p449
      %p451 = pneg %p450
      // Predicated region
      $region69: #{tpu_custom_call.1} parent=5 // pred_check
        _
      $region70: #{tpu_custom_call.1} parent=5 // pred_check_branch
        %453 = sbr.rel (%p450) target = $region72
      $region71: #{tpu_custom_call.1} parent=5 // pred_region
        %s454 = ssub.s32 %s23, 1
        %p455 = pneg %p44
        %p456 = pneg %p41
        %p457 = pneg %p65
        %p458 = pneg %p62
        %p459 = pneg %p86
        %p460 = pneg %p83
        %p461 = pneg %p107
        %p462 = pneg %p104
        %p463 = pneg %p128
        %p464 = pneg %p125
        %p465 = pneg %p149
        %p466 = pneg %p146
        %p467 = scmp.lt.s32.totalorder %s28, 2
        %s468 = scalar_select %p467, %s28, 2
        %s469 = smul.addr %s468, 8
        %s470 = smul.addr %s469, 8
        %s471 = scalar_lea.vmem %s6, %s470
        %p472 = pneg %p175
        %p473 = pneg %p172
        %p474 = scmp.lt.s32.totalorder %s28, 2
        %s475 = scalar_select %p474, %s28, 2
        %s476 = scalar_lea.vmem %s7, %s475
        %p477 = pneg %p201
        %p478 = pneg %p198
        %p479 = pneg %p222
        %p480 = pneg %p219
        %p481 = scmp.lt.s32.totalorder %s28, 2
        %s482 = scalar_select %p481, %s28, 2
        %s483 = smul.addr %s482, 8
        %s484 = smul.addr %s483, 8
        %s485 = scalar_lea.vmem %s9, %s484
        %p486 = pneg %p248
        %p487 = pneg %p245
        %p488 = scmp.lt.s32.totalorder %s28, 2
        %s489 = scalar_select %p488, %s28, 2
        %s490 = scalar_lea.vmem %s10, %s489
        %p491 = pneg %p274
        %p492 = pneg %p271
        %p493 = scmp.lt.s32.totalorder %s28, 2
        %s494 = scalar_select %p493, %s28, 2
        %s495 = scalar_lea.vmem %s11, %s494
        %p496 = pneg %p300
        %p497 = pneg %p297
        %p498 = scmp.lt.s32.totalorder %s28, 2
        %s499 = scalar_select %p498, %s28, 2
        %s500 = scalar_lea.vmem %s12, %s499
        %p501 = pneg %p326
        %p502 = pneg %p323
        %p503 = pneg %p347
        %p504 = pneg %p344
        %p505 = pneg %p368
        %p506 = pneg %p365
        %p507 = scmp.lt.s32.totalorder %s28, 2
        %s508 = scalar_select %p507, %s28, 2
        %s509 = smul.addr %s508, 8
        %s510 = smul.addr %s509, 8
        %s511 = scalar_lea.vmem %s6, %s510
        %p512 = scmp.lt.s32.totalorder %s28, 2
        %s513 = scalar_select %p512, %s28, 2
        %s514 = scalar_lea.vmem %s7, %s513
        %p515 = scmp.lt.s32.totalorder %s28, 2
        %s516 = scalar_select %p515, %s28, 2
        %s517 = smul.addr %s516, 8
        %s518 = smul.addr %s517, 8
        %s519 = scalar_lea.vmem %s9, %s518
        %p520 = scmp.lt.s32.totalorder %s28, 2
        %s521 = scalar_select %p520, %s28, 2
        %s522 = scalar_lea.vmem %s10, %s521
        %p523 = scmp.lt.s32.totalorder %s28, 2
        %s524 = scalar_select %p523, %s28, 2
        %s525 = scalar_lea.vmem %s11, %s524
        %p526 = scmp.lt.s32.totalorder %s28, 2
        %s527 = scalar_select %p526, %s28, 2
        %s528 = scalar_lea.vmem %s12, %s527
        %p529 = scmp.eq.s32.totalorder %s28, 0
        // Predicated region
        $region73: #{tpu_custom_call.1} parent=71 // pred_check
          %p530 = pneg %p529
        $region74: #{tpu_custom_call.1} parent=71 // pred_check_branch
          %532 = sbr.rel (%p530) target = $region76
        $region75: #{tpu_custom_call.1} parent=71 // pred_region
          %v533 = vld [vmem:[%s0] sm:$0xff]
          %v534 = vld [vmem:[%s0 + $0x8] sm:$0xff]
          %v535 = vld [vmem:[%s2] sm:$0xff]
          %v536 = vld [vmem:[%s2 + $0x8] sm:$0xff]
          %v537 = vld [vmem:[%s3] sm:$0xff]
          %vm538 = vcmask 64512
          %v540 = vsel %vm538, %v535, 0
          %v543 = vsel %vm538, %v536, 0
          %545 = vmatprep.subr.mxu0 0.0
          %546 = vmatpush1.msra.mxu0 %v537
          %547 = vmatprep.subr.mxu0 0.0
          %548 = vmatpush1.msra.mxu0 0.0
          %549 = vmatprep.subr.mxu0 0.0
          %550 = vmatpush1.msra.mxu0 0.0
          %551 = vmatprep.subr.mxu0 0.0
          %552 = vmatpush1.msra.mxu0 0.0
          %553 = vmatprep.subr.mxu0 0.0
          %554 = vmatpush1.msra.mxu0 0.0
          %555 = vmatprep.subr.mxu0 0.0
          %556 = vmatpush1.msra.mxu0 0.0
          %557 = vmatprep.subr.mxu0 0.0
          %558 = vmatpush1.msra.mxu0 0.0
          %559 = vmatprep.subr.mxu0 0.0
          %560 = vmatpush1.msra.mxu0 0.0
          %561 = vmatprep.subr.mxu0 0.0
          %562 = vmatpush1.msra.mxu0 0.0
          %563 = vmatprep.subr.mxu0 0.0
          %564 = vmatpush1.msra.mxu0 0.0
          %565 = vmatprep.subr.mxu0 0.0
          %566 = vmatpush1.msra.mxu0 0.0
          %567 = vmatprep.subr.mxu0 0.0
          %568 = vmatpush1.msra.mxu0 0.0
          %569 = vmatprep.subr.mxu0 0.0
          %570 = vmatpush1.msra.mxu0 0.0
          %571 = vmatprep.subr.mxu0 0.0
          %572 = vmatpush1.msra.mxu0 0.0
          %573 = vmatprep.subr.mxu0 0.0
          %574 = vmatpush1.msra.mxu0 0.0
          %575 = vmatprep.subr.mxu0 0.0
          %576 = vmatpush1.msra.mxu0 0.0
          %577 = vmatprep.subr.mxu0 0.0
          %578 = vmatpush1.msra.mxu0 0.0
          %579 = vmatprep.subr.mxu0 0.0
          %580 = vmatpush1.msra.mxu0 0.0
          %581 = vmatprep.subr.mxu0 0.0
          %582 = vmatpush1.msra.mxu0 0.0
          %583 = vmatprep.subr.mxu0 0.0
          %584 = vmatpush1.msra.mxu0 0.0
          %585 = vmatprep.subr.mxu0 0.0
          %586 = vmatpush1.msra.mxu0 0.0
          %587 = vmatprep.subr.mxu0 0.0
          %588 = vmatpush1.msra.mxu0 0.0
          %589 = vmatprep.subr.mxu0 0.0
          %590 = vmatpush1.msra.mxu0 0.0
          %591 = vmatprep.subr.mxu0 0.0
          %592 = vmatpush1.msra.mxu0 0.0
          %593 = vmatprep.subr.mxu0 0.0
          %594 = vmatpush1.msra.mxu0 0.0
          %595 = vmatprep.subr.mxu0 0.0
          %596 = vmatpush1.msra.mxu0 0.0
          %597 = vmatprep.subr.mxu0 0.0
          %598 = vmatpush1.msra.mxu0 0.0
          %599 = vmatprep.subr.mxu0 0.0
          %600 = vmatpush1.msra.mxu0 0.0
          %601 = vmatprep.subr.mxu0 0.0
          %602 = vmatpush1.msra.mxu0 0.0
          %603 = vmatprep.subr.mxu0 0.0
          %604 = vmatpush1.msra.mxu0 0.0
          %605 = vmatprep.subr.mxu0 0.0
          %606 = vmatpush1.msra.mxu0 0.0
          %607 = vmatprep.subr.mxu0 0.0
          %608 = vmatpush1.msra.mxu0 0.0
          %609 = vmatprep.mubr.f32.mxu0 0.0
          %610 = vmatmul.mubr.f32.gmra.mrb[0].mxu0 %v540
          %v611 = vpop.f32.mrb[0].mxu0
          %v612 = vadd.f32 0.0, %v611
          %v613 = vpop.f32.mrb[0].mxu0
          %614 = vmatprep.mubr.f32.mxu0 0.0
          %615 = vmatmul.mubr.f32.gmra.mrb[0].mxu0 %v543
          %v616 = vpop.f32.mrb[0].mxu0
          %v617 = vadd.f32 0.0, %v616
          %v618 = vpop.f32.mrb[0].mxu0
          %619 = vdwg.mxu0
          %v620 = vadd.f32 %v533, %v612
          %v621 = vadd.f32 %v534, %v617
          %v622 = vld [vmem:[%s4] sm:$0x1]
          %v624 = vlaneseq
          %v625 = vshrl.u32 %v624, 7
          %v626 = vsub.s32 0, %v625
          %v627 = vrot.slane %v622, %v626
          %v629 = vadd.f32 %v620, %v627
          %v630 = vadd.f32 %v621, %v627
          %vm631 = vcmask 261120
          %632 = vst.msk [vmem:[#allocation2] sm:$0xff] %vm631, %v629
          %633 = vst.msk [vmem:[#allocation2 + $0x8] sm:$0xff] %vm631, %v630
          %v634 = vld [vmem:[%s1] sm:$0xff]
          %v635 = vld [vmem:[%s1 + $0x8] sm:$0xff]
          %v636 = vld [vmem:[%s1 + $0x10] sm:$0xff]
          %637 = vst.msk [vmem:[#allocation4] sm:$0xff] %vm631, %v634
          %638 = vst.msk [vmem:[#allocation4 + $0x8] sm:$0xff] %vm631, %v635
          %639 = vst.msk [vmem:[#allocation4 + $0x10] sm:$0xff] %vm631, %v636
        $region76: #{tpu_custom_call.1} parent=71 // pred_fallthru
          _
        %v640 = vld [vmem:[#allocation2] sm:$0xff]
        %v641 = vld [vmem:[#allocation2 + $0x8] sm:$0xff]
        %v642 = vld [vmem:[#allocation4] sm:$0xff]
        %v643 = vld [vmem:[#allocation4 + $0x8] sm:$0xff]
        %v644 = vld [vmem:[#allocation4 + $0x10] sm:$0xff]
        %v645 = vld [vmem:[%s5] sm:$0xff]
        %v646 = vld [vmem:[%s5 + $0x8] sm:$0xff]
        %v647 = vld [vmem:[%s5 + $0x10] sm:$0xff]
        %vm648 = vcmask 130048
        %v650 = vsel %vm648, %v645, 0
        %v653 = vsel %vm648, %v646, 0
        %v656 = vsel %vm648, %v647, 0
        %658 = vmatprep.subr.mxu0 0.0
        %659 = vmatpush1.msra.mxu0 %v640
        %660 = vmatprep.subr.mxu0 0.0
        %661 = vmatpush1.msra.mxu0 %v641
        %662 = vmatprep.subr.mxu0 0.0
        %663 = vmatpush1.msra.mxu0 0.0
        %664 = vmatprep.subr.mxu0 0.0
        %665 = vmatpush1.msra.mxu0 0.0
        %666 = vmatprep.subr.mxu0 0.0
        %667 = vmatpush1.msra.mxu0 0.0
        %668 = vmatprep.subr.mxu0 0.0
        %669 = vmatpush1.msra.mxu0 0.0
        %670 = vmatprep.subr.mxu0 0.0
        %671 = vmatpush1.msra.mxu0 0.0
        %672 = vmatprep.subr.mxu0 0.0
        %673 = vmatpush1.msra.mxu0 0.0
        %674 = vmatprep.subr.mxu0 0.0
        %675 = vmatpush1.msra.mxu0 0.0
        %676 = vmatprep.subr.mxu0 0.0
        %677 = vmatpush1.msra.mxu0 0.0
        %678 = vmatprep.subr.mxu0 0.0
        %679 = vmatpush1.msra.mxu0 0.0
        %680 = vmatprep.subr.mxu0 0.0
        %681 = vmatpush1.msra.mxu0 0.0
        %682 = vmatprep.subr.mxu0 0.0
        %683 = vmatpush1.msra.mxu0 0.0
        %684 = vmatprep.subr.mxu0 0.0
        %685 = vmatpush1.msra.mxu0 0.0
        %686 = vmatprep.subr.mxu0 0.0
        %687 = vmatpush1.msra.mxu0 0.0
        %688 = vmatprep.subr.mxu0 0.0
        %689 = vmatpush1.msra.mxu0 0.0
        %690 = vmatprep.subr.mxu0 0.0
        %691 = vmatpush1.msra.mxu0 0.0
        %692 = vmatprep.subr.mxu0 0.0
        %693 = vmatpush1.msra.mxu0 0.0
        %694 = vmatprep.subr.mxu0 0.0
        %695 = vmatpush1.msra.mxu0 0.0
        %696 = vmatprep.subr.mxu0 0.0
        %697 = vmatpush1.msra.mxu0 0.0
        %698 = vmatprep.subr.mxu0 0.0
        %699 = vmatpush1.msra.mxu0 0.0
        %700 = vmatprep.subr.mxu0 0.0
        %701 = vmatpush1.msra.mxu0 0.0
        %702 = vmatprep.subr.mxu0 0.0
        %703 = vmatpush1.msra.mxu0 0.0
        %704 = vmatprep.subr.mxu0 0.0
        %705 = vmatpush1.msra.mxu0 0.0
        %706 = vmatprep.subr.mxu0 0.0
        %707 = vmatpush1.msra.mxu0 0.0
        %708 = vmatprep.subr.mxu0 0.0
        %709 = vmatpush1.msra.mxu0 0.0
        %710 = vmatprep.subr.mxu0 0.0
        %711 = vmatpush1.msra.mxu0 0.0
        %712 = vmatprep.subr.mxu0 0.0
        %713 = vmatpush1.msra.mxu0 0.0
        %714 = vmatprep.subr.mxu0 0.0
        %715 = vmatpush1.msra.mxu0 0.0
        %716 = vmatprep.subr.mxu0 0.0
        %717 = vmatpush1.msra.mxu0 0.0
        %718 = vmatprep.subr.mxu0 0.0
        %719 = vmatpush1.msra.mxu0 0.0
        %720 = vmatprep.subr.mxu0 0.0
        %721 = vmatpush1.msra.mxu0 0.0
        %722 = vmatprep.mubr.f32.mxu0 0.0
        %723 = vmatmul.mubr.f32.gmra.mrb[0].mxu0 %v650
        %v724 = vpop.f32.mrb[0].mxu0
        %v725 = vadd.f32 0.0, %v724
        %v726 = vpop.f32.mrb[0].mxu0
        %727 = vmatprep.mubr.f32.mxu0 0.0
        %728 = vmatmul.mubr.f32.gmra.mrb[0].mxu0 %v653
        %v729 = vpop.f32.mrb[0].mxu0
        %v730 = vadd.f32 0.0, %v729
        %v731 = vpop.f32.mrb[0].mxu0
        %732 = vmatprep.mubr.f32.mxu0 0.0
        %733 = vmatmul.mubr.f32.gmra.mrb[0].mxu0 %v656
        %v734 = vpop.f32.mrb[0].mxu0
        %v735 = vadd.f32 0.0, %v734
        %v736 = vpop.f32.mrb[0].mxu0
        %737 = vdwg.mxu0
        %741 = vrot.lane.b32.xlu0 %v642, 32
        %v742 = vpop.permute.xlu0 %741
        %743 = vrot.lane.b32.xlu0 %v643, 32
        %v744 = vpop.permute.xlu0 %743
        %745 = vrot.lane.b32.xlu0 %v644, 32
        %v746 = vpop.permute.xlu0 %745
        %vm750 = vcmask 261120
        %v751 = vsel %vm750, %v725, %v742
        %v752 = vsel %vm750, %v730, %v744
        %v753 = vsel %vm750, %v735, %v746
        %v754 = vld [vmem:[%s511] sm:$0xff]
        %v755 = vld [vmem:[%s511 + $0x8] sm:$0xff]
        %v756 = vld [vmem:[%s511 + $0x10] sm:$0xff]
        %v757 = vld [vmem:[%s511 + $0x18] sm:$0xff]
        %v758 = vld [vmem:[%s511 + $0x20] sm:$0xff]
        %v759 = vld [vmem:[%s511 + $0x28] sm:$0xff]
        %v760 = vld [vmem:[%s511 + $0x30] sm:$0xff]
        %v761 = vld [vmem:[%s511 + $0x38] sm:$0xff]
        %v762 = vld [vmem:[%s514] sm:$0x1]
        %v764 = vlaneseq
        %v765 = vshrl.u32 %v764, 7
        %v766 = vsub.s32 0, %v765
        %v767 = vrot.slane %v762, %v766
        %vm769 = vcmask 523264
        %v771 = vsel %vm769, %v751, 0
        %v774 = vsel %vm769, %v752, 0
        %v777 = vsel %vm769, %v753, 0
        %779 = vmatprep.subr.mxu0 0.0
        %780 = vmatpush1.msra.mxu0 %v754
        %781 = vmatprep.subr.mxu0 0.0
        %782 = vmatpush1.msra.mxu0 %v755
        %783 = vmatprep.subr.mxu0 0.0
        %784 = vmatpush1.msra.mxu0 %v756
        %785 = vmatprep.subr.mxu0 0.0
        %786 = vmatpush1.msra.mxu0 %v757
        %787 = vmatprep.subr.mxu0 0.0
        %788 = vmatpush1.msra.mxu0 %v758
        %789 = vmatprep.subr.mxu0 0.0
        %790 = vmatpush1.msra.mxu0 %v759
        %791 = vmatprep.subr.mxu0 0.0
        %792 = vmatpush1.msra.mxu0 %v760
        %793 = vmatprep.subr.mxu0 0.0
        %794 = vmatpush1.msra.mxu0 %v761
        %795 = vmatprep.subr.mxu0 0.0
        %796 = vmatpush1.msra.mxu0 0.0
        %797 = vmatprep.subr.mxu0 0.0
        %798 = vmatpush1.msra.mxu0 0.0
        %799 = vmatprep.subr.mxu0 0.0
        %800 = vmatpush1.msra.mxu0 0.0
        %801 = vmatprep.subr.mxu0 0.0
        %802 = vmatpush1.msra.mxu0 0.0
        %803 = vmatprep.subr.mxu0 0.0
        %804 = vmatpush1.msra.mxu0 0.0
        %805 = vmatprep.subr.mxu0 0.0
        %806 = vmatpush1.msra.mxu0 0.0
        %807 = vmatprep.subr.mxu0 0.0
        %808 = vmatpush1.msra.mxu0 0.0
        %809 = vmatprep.subr.mxu0 0.0
        %810 = vmatpush1.msra.mxu0 0.0
        %811 = vmatprep.subr.mxu0 0.0
        %812 = vmatpush1.msra.mxu0 0.0
        %813 = vmatprep.subr.mxu0 0.0
        %814 = vmatpush1.msra.mxu0 0.0
        %815 = vmatprep.subr.mxu0 0.0
        %816 = vmatpush1.msra.mxu0 0.0
        %817 = vmatprep.subr.mxu0 0.0
        %818 = vmatpush1.msra.mxu0 0.0
        %819 = vmatprep.subr.mxu0 0.0
        %820 = vmatpush1.msra.mxu0 0.0
        %821 = vmatprep.subr.mxu0 0.0
        %822 = vmatpush1.msra.mxu0 0.0
        %823 = vmatprep.subr.mxu0 0.0
        %824 = vmatpush1.msra.mxu0 0.0
        %825 = vmatprep.subr.mxu0 0.0
        %826 = vmatpush1.msra.mxu0 0.0
        %827 = vmatprep.subr.mxu0 0.0
        %828 = vmatpush1.msra.mxu0 0.0
        %829 = vmatprep.subr.mxu0 0.0
        %830 = vmatpush1.msra.mxu0 0.0
        %831 = vmatprep.subr.mxu0 0.0
        %832 = vmatpush1.msra.mxu0 0.0
        %833 = vmatprep.subr.mxu0 0.0
        %834 = vmatpush1.msra.mxu0 0.0
        %835 = vmatprep.subr.mxu0 0.0
        %836 = vmatpush1.msra.mxu0 0.0
        %837 = vmatprep.subr.mxu0 0.0
        %838 = vmatpush1.msra.mxu0 0.0
        %839 = vmatprep.subr.mxu0 0.0
        %840 = vmatpush1.msra.mxu0 0.0
        %841 = vmatprep.subr.mxu0 0.0
        %842 = vmatpush1.msra.mxu0 0.0
        %843 = vmatprep.mubr.f32.mxu0 0.0
        %844 = vmatmul.mubr.f32.gmra.mrb[0].mxu0 %v771
        %v845 = vpop.f32.mrb[0].mxu0
        %v846 = vadd.f32 %v767, %v845
        %v847 = vpop.f32.mrb[0].mxu0
        %848 = vmatprep.mubr.f32.mxu0 0.0
        %849 = vmatmul.mubr.f32.gmra.mrb[0].mxu0 %v774
        %v850 = vpop.f32.mrb[0].mxu0
        %v851 = vadd.f32 %v767, %v850
        %v852 = vpop.f32.mrb[0].mxu0
        %853 = vmatprep.mubr.f32.mxu0 0.0
        %854 = vmatmul.mubr.f32.gmra.mrb[0].mxu0 %v777
        %v855 = vpop.f32.mrb[0].mxu0
        %v856 = vadd.f32 %v767, %v855
        %v857 = vpop.f32.mrb[0].mxu0
        %858 = vdwg.mxu0
        %v859 = vld [vmem:[%s8] sm:$0xff]
        %v860 = vld [vmem:[%s8 + $0x8] sm:$0xff]
        %vm861 = vcmask 195584
        %v863 = vsel %vm861, %v859, 0
        %v866 = vsel %vm861, %v860, 0
        %868 = vmatprep.subr.mxu0 0.0
        %869 = vmatpush1.msra.mxu0 %v642
        %870 = vmatprep.subr.mxu0 0.0
        %871 = vmatpush1.msra.mxu0 %v643
        %872 = vmatprep.subr.mxu0 0.0
        %873 = vmatpush1.msra.mxu0 %v644
        %874 = vmatprep.subr.mxu0 0.0
        %875 = vmatpush1.msra.mxu0 0.0
        %876 = vmatprep.subr.mxu0 0.0
        %877 = vmatpush1.msra.mxu0 0.0
        %878 = vmatprep.subr.mxu0 0.0
        %879 = vmatpush1.msra.mxu0 0.0
        %880 = vmatprep.subr.mxu0 0.0
        %881 = vmatpush1.msra.mxu0 0.0
        %882 = vmatprep.subr.mxu0 0.0
        %883 = vmatpush1.msra.mxu0 0.0
        %884 = vmatprep.subr.mxu0 0.0
        %885 = vmatpush1.msra.mxu0 0.0
        %886 = vmatprep.subr.mxu0 0.0
        %887 = vmatpush1.msra.mxu0 0.0
        %888 = vmatprep.subr.mxu0 0.0
        %889 = vmatpush1.msra.mxu0 0.0
        %890 = vmatprep.subr.mxu0 0.0
        %891 = vmatpush1.msra.mxu0 0.0
        %892 = vmatprep.subr.mxu0 0.0
        %893 = vmatpush1.msra.mxu0 0.0
        %894 = vmatprep.subr.mxu0 0.0
        %895 = vmatpush1.msra.mxu0 0.0
        %896 = vmatprep.subr.mxu0 0.0
        %897 = vmatpush1.msra.mxu0 0.0
        %898 = vmatprep.subr.mxu0 0.0
        %899 = vmatpush1.msra.mxu0 0.0
        %900 = vmatprep.subr.mxu0 0.0
        %901 = vmatpush1.msra.mxu0 0.0
        %902 = vmatprep.subr.mxu0 0.0
        %903 = vmatpush1.msra.mxu0 0.0
        %904 = vmatprep.subr.mxu0 0.0
        %905 = vmatpush1.msra.mxu0 0.0
        %906 = vmatprep.subr.mxu0 0.0
        %907 = vmatpush1.msra.mxu0 0.0
        %908 = vmatprep.subr.mxu0 0.0
        %909 = vmatpush1.msra.mxu0 0.0
        %910 = vmatprep.subr.mxu0 0.0
        %911 = vmatpush1.msra.mxu0 0.0
        %912 = vmatprep.subr.mxu0 0.0
        %913 = vmatpush1.msra.mxu0 0.0
        %914 = vmatprep.subr.mxu0 0.0
        %915 = vmatpush1.msra.mxu0 0.0
        %916 = vmatprep.subr.mxu0 0.0
        %917 = vmatpush1.msra.mxu0 0.0
        %918 = vmatprep.subr.mxu0 0.0
        %919 = vmatpush1.msra.mxu0 0.0
        %920 = vmatprep.subr.mxu0 0.0
        %921 = vmatpush1.msra.mxu0 0.0
        %922 = vmatprep.subr.mxu0 0.0
        %923 = vmatpush1.msra.mxu0 0.0
        %924 = vmatprep.subr.mxu0 0.0
        %925 = vmatpush1.msra.mxu0 0.0
        %926 = vmatprep.subr.mxu0 0.0
        %927 = vmatpush1.msra.mxu0 0.0
        %928 = vmatprep.subr.mxu0 0.0
        %929 = vmatpush1.msra.mxu0 0.0
        %930 = vmatprep.subr.mxu0 0.0
        %931 = vmatpush1.msra.mxu0 0.0
        %932 = vmatprep.mubr.f32.mxu0 0.0
        %933 = vmatmul.mubr.f32.gmra.mrb[0].mxu0 %v863
        %v934 = vpop.f32.mrb[0].mxu0
        %v935 = vadd.f32 0.0, %v934
        %v936 = vpop.f32.mrb[0].mxu0
        %937 = vmatprep.mubr.f32.mxu0 0.0
        %938 = vmatmul.mubr.f32.gmra.mrb[0].mxu0 %v866
        %v939 = vpop.f32.mrb[0].mxu0
        %v940 = vadd.f32 0.0, %v939
        %v941 = vpop.f32.mrb[0].mxu0
        %942 = vdwg.mxu0
        %945 = vrot.lane.b32.xlu0 %v640, 32
        %v946 = vpop.permute.xlu0 %945
        %947 = vrot.lane.b32.xlu0 %v641, 32
        %v948 = vpop.permute.xlu0 %947
        %v951 = vsel %vm750, %v935, %v946
        %v952 = vsel %vm750, %v940, %v948
        %v953 = vld [vmem:[%s519] sm:$0xff]
        %v954 = vld [vmem:[%s519 + $0x8] sm:$0xff]
        %v955 = vld [vmem:[%s519 + $0x10] sm:$0xff]
        %v956 = vld [vmem:[%s519 + $0x18] sm:$0xff]
        %v957 = vld [vmem:[%s519 + $0x20] sm:$0xff]
        %v958 = vld [vmem:[%s519 + $0x28] sm:$0xff]
        %v959 = vld [vmem:[%s519 + $0x30] sm:$0xff]
        %v960 = vld [vmem:[%s519 + $0x38] sm:$0xff]
        %v961 = vld [vmem:[%s522] sm:$0x1]
        %v963 = vlaneseq
        %v964 = vshrl.u32 %v963, 7
        %v965 = vsub.s32 0, %v964
        %v966 = vrot.slane %v961, %v965
        %v969 = vsel %vm769, %v951, 0
        %v972 = vsel %vm769, %v952, 0
        %974 = vmatprep.subr.mxu0 0.0
        %975 = vmatpush1.msra.mxu0 %v953
        %976 = vmatprep.subr.mxu0 0.0
        %977 = vmatpush1.msra.mxu0 %v954
        %978 = vmatprep.subr.mxu0 0.0
        %979 = vmatpush1.msra.mxu0 %v955
        %980 = vmatprep.subr.mxu0 0.0
        %981 = vmatpush1.msra.mxu0 %v956
        %982 = vmatprep.subr.mxu0 0.0
        %983 = vmatpush1.msra.mxu0 %v957
        %984 = vmatprep.subr.mxu0 0.0
        %985 = vmatpush1.msra.mxu0 %v958
        %986 = vmatprep.subr.mxu0 0.0
        %987 = vmatpush1.msra.mxu0 %v959
        %988 = vmatprep.subr.mxu0 0.0
        %989 = vmatpush1.msra.mxu0 %v960
        %990 = vmatprep.subr.mxu0 0.0
        %991 = vmatpush1.msra.mxu0 0.0
        %992 = vmatprep.subr.mxu0 0.0
        %993 = vmatpush1.msra.mxu0 0.0
        %994 = vmatprep.subr.mxu0 0.0
        %995 = vmatpush1.msra.mxu0 0.0
        %996 = vmatprep.subr.mxu0 0.0
        %997 = vmatpush1.msra.mxu0 0.0
        %998 = vmatprep.subr.mxu0 0.0
        %999 = vmatpush1.msra.mxu0 0.0
        %1000 = vmatprep.subr.mxu0 0.0
        %1001 = vmatpush1.msra.mxu0 0.0
        %1002 = vmatprep.subr.mxu0 0.0
        %1003 = vmatpush1.msra.mxu0 0.0
        %1004 = vmatprep.subr.mxu0 0.0
        %1005 = vmatpush1.msra.mxu0 0.0
        %1006 = vmatprep.subr.mxu0 0.0
        %1007 = vmatpush1.msra.mxu0 0.0
        %1008 = vmatprep.subr.mxu0 0.0
        %1009 = vmatpush1.msra.mxu0 0.0
        %1010 = vmatprep.subr.mxu0 0.0
        %1011 = vmatpush1.msra.mxu0 0.0
        %1012 = vmatprep.subr.mxu0 0.0
        %1013 = vmatpush1.msra.mxu0 0.0
        %1014 = vmatprep.subr.mxu0 0.0
        %1015 = vmatpush1.msra.mxu0 0.0
        %1016 = vmatprep.subr.mxu0 0.0
        %1017 = vmatpush1.msra.mxu0 0.0
        %1018 = vmatprep.subr.mxu0 0.0
        %1019 = vmatpush1.msra.mxu0 0.0
        %1020 = vmatprep.subr.mxu0 0.0
        %1021 = vmatpush1.msra.mxu0 0.0
        %1022 = vmatprep.subr.mxu0 0.0
        %1023 = vmatpush1.msra.mxu0 0.0
        %1024 = vmatprep.subr.mxu0 0.0
        %1025 = vmatpush1.msra.mxu0 0.0
        %1026 = vmatprep.subr.mxu0 0.0
        %1027 = vmatpush1.msra.mxu0 0.0
        %1028 = vmatprep.subr.mxu0 0.0
        %1029 = vmatpush1.msra.mxu0 0.0
        %1030 = vmatprep.subr.mxu0 0.0
        %1031 = vmatpush1.msra.mxu0 0.0
        %1032 = vmatprep.subr.mxu0 0.0
        %1033 = vmatpush1.msra.mxu0 0.0
        %1034 = vmatprep.subr.mxu0 0.0
        %1035 = vmatpush1.msra.mxu0 0.0
        %1036 = vmatprep.subr.mxu0 0.0
        %1037 = vmatpush1.msra.mxu0 0.0
        %1038 = vmatprep.mubr.f32.mxu0 0.0
        %1039 = vmatmul.mubr.f32.gmra.mrb[0].mxu0 %v969
        %v1040 = vpop.f32.mrb[0].mxu0
        %v1041 = vadd.f32 %v966, %v1040
        %v1042 = vpop.f32.mrb[0].mxu0
        %1043 = vmatprep.mubr.f32.mxu0 0.0
        %1044 = vmatmul.mubr.f32.gmra.mrb[0].mxu0 %v972
        %v1045 = vpop.f32.mrb[0].mxu0
        %v1046 = vadd.f32 %v966, %v1045
        %v1047 = vpop.f32.mrb[0].mxu0
        %1048 = vdwg.mxu0
        %v1049 = vld [vmem:[%s525] sm:$0x1]
        %v1050 = vld [vmem:[%s528] sm:$0x1]
        %v1051 = vmul.f32 %v1041, 0.5
        %v1052 = vmul.f32 %v1046, 0.5
        %v1053 = vmul.f32 %v1041, 0.70710677
        %v1054 = vmul.f32 %v1046, 0.70710677
        %v1055 = verf.f32.pop %v1053
        %v1056 = verf.f32.pop %v1054
        %v1057 = vadd.f32 %v1055, 1.0
        %v1058 = vadd.f32 %v1056, 1.0
        %v1059 = vmul.f32 %v1051, %v1057
        %v1060 = vmul.f32 %v1052, %v1058
        %v1061 = vsel %vm750, %v1059, 0.0
        %1062 = vadd.xlane.f32.xlu0 %v1061
        %v1063 = vpop.xlane.xlu0 %1062
        %v1064 = vsel %vm750, %v1060, 0.0
        %1065 = vadd.xlane.f32.xlu0 %v1064
        %v1066 = vpop.xlane.xlu0 %1065
        %v1067 = vrcp.pop 32.0
        %v1068 = vmul.f32 %v1063, %v1067
        %v1069 = vmul.f32 %v1066, %v1067
        %v1070 = vsub.f32 %v1059, %v1068
        %v1071 = vsub.f32 %v1060, %v1069
        %v1072 = vmul.f32 %v1070, %v1070
        %v1073 = vmul.f32 %v1071, %v1071
        %v1074 = vsel %vm750, %v1072, 0.0
        %1075 = vadd.xlane.f32.xlu0 %v1074
        %v1076 = vpop.xlane.xlu0 %1075
        %v1077 = vsel %vm750, %v1073, 0.0
        %1078 = vadd.xlane.f32.xlu0 %v1077
        %v1079 = vpop.xlane.xlu0 %1078
        %v1080 = vmul.f32 %v1076, %v1067
        %v1081 = vmul.f32 %v1079, %v1067
        %v1082 = vadd.f32 %v1080, 1e-05
        %v1083 = vadd.f32 %v1081, 1e-05
        %v1084 = vrsqrt.pop %v1082
        %v1085 = vrsqrt.pop %v1083
        %v1086 = vmul.f32 %v1070, %v1084
        %v1087 = vmul.f32 %v1071, %v1085
        %v1089 = vlaneseq
        %v1090 = vshrl.u32 %v1089, 7
        %v1091 = vsub.s32 0, %v1090
        %v1092 = vrot.slane %v1049, %v1091
        %v1094 = vmul.f32 %v1086, %v1092
        %v1095 = vmul.f32 %v1087, %v1092
        %v1097 = vlaneseq
        %v1098 = vshrl.u32 %v1097, 7
        %v1099 = vsub.s32 0, %v1098
        %v1100 = vrot.slane %v1050, %v1099
        %v1102 = vadd.f32 %v1094, %v1100
        %v1103 = vadd.f32 %v1095, %v1100
        %1104 = vst.msk [vmem:[#allocation2] sm:$0xff] %vm750, %v1102
        %1105 = vst.msk [vmem:[#allocation2 + $0x8] sm:$0xff] %vm750, %v1103
        %v1106 = vmul.f32 %v846, 0.5
        %v1107 = vmul.f32 %v851, 0.5
        %v1108 = vmul.f32 %v856, 0.5
        %v1109 = vmul.f32 %v846, 0.70710677
        %v1110 = vmul.f32 %v851, 0.70710677
        %v1111 = vmul.f32 %v856, 0.70710677
        %v1112 = verf.f32.pop %v1109
        %v1113 = verf.f32.pop %v1110
        %v1114 = verf.f32.pop %v1111
        %v1115 = vadd.f32 %v1112, 1.0
        %v1116 = vadd.f32 %v1113, 1.0
        %v1117 = vadd.f32 %v1114, 1.0
        %v1118 = vmul.f32 %v1106, %v1115
        %v1119 = vmul.f32 %v1107, %v1116
        %v1120 = vmul.f32 %v1108, %v1117
        %v1121 = vsel %vm750, %v1118, 0.0
        %1122 = vadd.xlane.f32.xlu0 %v1121
        %v1123 = vpop.xlane.xlu0 %1122
        %v1124 = vsel %vm750, %v1119, 0.0
        %1125 = vadd.xlane.f32.xlu0 %v1124
        %v1126 = vpop.xlane.xlu0 %1125
        %v1127 = vsel %vm750, %v1120, 0.0
        %1128 = vadd.xlane.f32.xlu0 %v1127
        %v1129 = vpop.xlane.xlu0 %1128
        %v1130 = vmul.f32 %v1123, %v1067
        %v1131 = vmul.f32 %v1126, %v1067
        %v1132 = vmul.f32 %v1129, %v1067
        %v1133 = vsub.f32 %v1118, %v1130
        %v1134 = vsub.f32 %v1119, %v1131
        %v1135 = vsub.f32 %v1120, %v1132
        %v1136 = vmul.f32 %v1133, %v1133
        %v1137 = vmul.f32 %v1134, %v1134
        %v1138 = vmul.f32 %v1135, %v1135
        %v1139 = vsel %vm750, %v1136, 0.0
        %1140 = vadd.xlane.f32.xlu0 %v1139
        %v1141 = vpop.xlane.xlu0 %1140
        %v1142 = vsel %vm750, %v1137, 0.0
        %1143 = vadd.xlane.f32.xlu0 %v1142
        %v1144 = vpop.xlane.xlu0 %1143
        %v1145 = vsel %vm750, %v1138, 0.0
        %1146 = vadd.xlane.f32.xlu0 %v1145
        %v1147 = vpop.xlane.xlu0 %1146
        %v1148 = vmul.f32 %v1141, %v1067
        %v1149 = vmul.f32 %v1144, %v1067
        %v1150 = vmul.f32 %v1147, %v1067
        %v1151 = vadd.f32 %v1148, 1e-05
        %v1152 = vadd.f32 %v1149, 1e-05
        %v1153 = vadd.f32 %v1150, 1e-05
        %v1154 = vrsqrt.pop %v1151
        %v1155 = vrsqrt.pop %v1152
        %v1156 = vrsqrt.pop %v1153
        %v1157 = vmul.f32 %v1133, %v1154
        %v1158 = vmul.f32 %v1134, %v1155
        %v1159 = vmul.f32 %v1135, %v1156
        %v1160 = vmul.f32 %v1157, %v1092
        %v1161 = vmul.f32 %v1158, %v1092
        %v1162 = vmul.f32 %v1159, %v1092
        %v1163 = vadd.f32 %v1160, %v1100
        %v1164 = vadd.f32 %v1161, %v1100
        %v1165 = vadd.f32 %v1162, %v1100
        %1166 = vst.msk [vmem:[#allocation4] sm:$0xff] %vm750, %v1163
        %1167 = vst.msk [vmem:[#allocation4 + $0x8] sm:$0xff] %vm750, %v1164
        %1168 = vst.msk [vmem:[#allocation4 + $0x10] sm:$0xff] %vm750, %v1165
        // Predicated region
        $region77: #{tpu_custom_call.1} parent=71 // pred_check
          %p1169 = pneg %p344
        $region78: #{tpu_custom_call.1} parent=71 // pred_check_branch
          %1171 = sbr.rel (%p1169) target = $region80
        $region79: #{tpu_custom_call.1} parent=71 // pred_region
          %s1173 = ssub.s32 256, 256
          %1174 = vsyncadd [#allocation3], %s1173
          %s1175 = sshll.u32 [#allocation2], 4
          %s1176 = int_to_ptr.vmem [resolvable:$true] %s1175
          %1181 = dma.vmem_to_hbm [thread:$0]  %s1176, 256, %s13, [#allocation3], 128, 128, 8
        $region80: #{tpu_custom_call.1} parent=71 // pred_fallthru
          _
        // Predicated region
        $region81: #{tpu_custom_call.1} parent=71 // pred_check
          %p1182 = pneg %p365
        $region82: #{tpu_custom_call.1} parent=71 // pred_check_branch
          %1184 = sbr.rel (%p1182) target = $region84
        $region83: #{tpu_custom_call.1} parent=71 // pred_region
          %s1186 = ssub.s32 384, 384
          %1187 = vsyncadd [#allocation5], %s1186
          %s1188 = sshll.u32 [#allocation4], 4
          %s1189 = int_to_ptr.vmem [resolvable:$true] %s1188
          %1194 = dma.vmem_to_hbm [thread:$0]  %s1189, 384, %s14, [#allocation5], 128, 128, 8
        $region84: #{tpu_custom_call.1} parent=71 // pred_fallthru
          _
        // Predicated region
        $region85: #{tpu_custom_call.1} parent=71 // pred_check
          %p1195 = pneg %p344
        $region86: #{tpu_custom_call.1} parent=71 // pred_check_branch
          %1197 = sbr.rel (%p1195) target = $region88
        $region87: #{tpu_custom_call.1} parent=71 // pred_region
          %1198 = dma.done [#allocation3], 256
        $region88: #{tpu_custom_call.1} parent=71 // pred_fallthru
          _
        // Predicated region
        $region89: #{tpu_custom_call.1} parent=71 // pred_check
          %p1199 = pneg %p365
        $region90: #{tpu_custom_call.1} parent=71 // pred_check_branch
          %1201 = sbr.rel (%p1199) target = $region92
        $region91: #{tpu_custom_call.1} parent=71 // pred_region
          %1202 = dma.done [#allocation5], 384
        $region92: #{tpu_custom_call.1} parent=71 // pred_fallthru
          _
      $region72: #{tpu_custom_call.1} parent=5 // pred_fallthru
        _
      %p1203 = scmp.le.s32.totalorder 2, %s23
      // Predicated region
      $region93: #{tpu_custom_call.1} parent=5 // pred_check
        %p1204 = pneg %p1203
      $region94: #{tpu_custom_call.1} parent=5 // pred_check_branch
        %1206 = sbr.rel (%p1204) target = $region96
      $region95: #{tpu_custom_call.1} parent=5 // pred_region
        %s1207 = ssub.s32 %s23, 2
      $region96: #{tpu_custom_call.1} parent=5 // pred_fallthru
        _
    $region6: #{tpu_custom_call.1} parent=1 // loop_footer
      %s27 = sadd.s32 1, %s23
    $region7: #{tpu_custom_call.1} parent=1 // loop_footer_branch
      %22 = sbr.rel target = $region3
    $region8: #{tpu_custom_call.1} parent=1 // loop_exit
      _
    %1208 = vsyncpa [#allocation3], 1
    %s1209 = scalar_lea.sflag [#allocation3], 1
    %1210 = vsyncpa %s1209, 1
    %1211 = vsyncpa [#allocation5], 1

</llo_original>
